<compile_context>
chip_gen: v7x
topology: tpu7x:2x2x1
jax: 0.10.0
libtpu: 0.0.40
codegen_flags: <defaults>
</compile_context>

<pallas_src>
import jax
import jax.numpy as jnp
from jax import lax
from jax.experimental import pallas as pl
from jax.experimental.pallas import tpu as pltpu


# ----------------------------- Pallas kernel --------------------------------
def rnn_classifier_kernel(
    gi_f_ref,   # (T, B, 3H) f32  precomputed x@W_ih_f^T + b_ih_f, gate cols [r|z|n]
    gi_b_ref,   # (T, B, 3H) f32  precomputed x@W_ih_b^T + b_ih_b
    len_ref,    # (B, 1)     i32  sequence lengths (sorted descending)
    whh_f_ref,  # (H, 3H)    f32  fused forward recurrent weights (W_hh_f^T)
    bhh_f_ref,  # (1, 3H)    f32
    whh_b_ref,  # (H, 3H)    f32  fused backward recurrent weights (W_hh_b^T)
    bhh_b_ref,  # (1, 3H)    f32
    wfc_ref,    # (2H, O)    f32  fc weight transposed; rows = [backward_h, forward_h]
    bfc_ref,    # (1, O)     f32
    out_ref,    # (B, O)     f32
):
    T, B, G = gi_f_ref.shape
    H = G // 3

    lengths = len_ref[...]                       # (B, 1) int32

    # Small weights at H=32: load once. (At H>=128 keep these as refs and read
    # inside the loop instead, to avoid vreg spill.)
    whh_f = whh_f_ref[...]
    bhh_f = bhh_f_ref[...]
    whh_b = whh_b_ref[...]
    bhh_b = bhh_b_ref[...]

    def gru_cell(gi, h, whh, bhh):
        # One fused (B,H)x(H,3H) matmul on the serial path; PyTorch gate order [r,z,n].
        gh = jnp.dot(h, whh, preferred_element_type=jnp.float32) + bhh   # (B, 3H)
        r = jax.nn.sigmoid(gi[:, :H] + gh[:, :H])
        z = jax.nn.sigmoid(gi[:, H:2 * H] + gh[:, H:2 * H])
        n = jnp.tanh(gi[:, 2 * H:] + r * gh[:, 2 * H:])
        return (1.0 - z) * n + z * h

    # Merged forward/backward recurrence: iteration i does forward step t=i and
    # backward step t=T-1-i (independent chains interleave on MXU/EUP).
    def body(i, carry):
        h_f, h_b = carry
        t_f = i
        t_b = T - 1 - i

        h_f_new = gru_cell(gi_f_ref[t_f], h_f, whh_f, bhh_f)
        h_f = jnp.where(lengths > t_f, h_f_new, h_f)

        h_b_new = gru_cell(gi_b_ref[t_b], h_b, whh_b, bhh_b)
        h_b = jnp.where(lengths > t_b, h_b_new, h_b)
        return (h_f, h_b)

    h0 = jnp.zeros((B, H), jnp.float32)
    h_f, h_b = lax.fori_loop(0, T, body, (h0, h0), unroll=True)

    # hidden_cat = cat([hidden[-1], hidden[-2]], dim=1) = [backward_h, forward_h]
    h_cat = jnp.concatenate([h_b, h_f], axis=1)                      # (B, 2H)
    out_ref[...] = (jnp.dot(h_cat, wfc_ref[...], preferred_element_type=jnp.float32)
                    + bfc_ref[...])


# ------------------------------- wrapper -------------------------------------
def init_params(key, input_size, hidden_size, output_size):
    ks = jax.random.split(key, 12)
    s = 0.1
    H = hidden_size
    return {
        "embedding": jax.random.normal(ks[0], (input_size, H), jnp.float32) * s,
        # PyTorch GRU param layout: (3H, H), rows stacked [W_r; W_z; W_n]
        "w_ih_f": jax.random.normal(ks[1], (3 * H, H), jnp.float32) * s,
        "w_hh_f": jax.random.normal(ks[2], (3 * H, H), jnp.float32) * s,
        "b_ih_f": jax.random.normal(ks[3], (3 * H,), jnp.float32) * s,
        "b_hh_f": jax.random.normal(ks[4], (3 * H,), jnp.float32) * s,
        "w_ih_b": jax.random.normal(ks[5], (3 * H, H), jnp.float32) * s,
        "w_hh_b": jax.random.normal(ks[6], (3 * H, H), jnp.float32) * s,
        "b_ih_b": jax.random.normal(ks[7], (3 * H,), jnp.float32) * s,
        "b_hh_b": jax.random.normal(ks[8], (3 * H,), jnp.float32) * s,
        "w_fc": jax.random.normal(ks[9], (output_size, 2 * H), jnp.float32) * s,
        "b_fc": jax.random.normal(ks[10], (output_size,), jnp.float32) * s,
    }


def rnn_classifier_forward(tokens, seq_lengths, params, hidden_size, output_size):
    B, T = tokens.shape
    H = hidden_size

    # glue: embedding lookup + transpose to time-major (seq, batch, hidden)
    emb = params["embedding"][tokens]                          # (B, T, H)
    emb = jnp.transpose(emb, (1, 0, 2)).astype(jnp.float32)    # (T, B, H)
    lens = seq_lengths.astype(jnp.int32).reshape(B, 1)

    # Fused gate weights: W.T is (H, 3H) with column blocks in [r|z|n] order.
    wih_f = params["w_ih_f"].T
    whh_f = params["w_hh_f"].T
    wih_b = params["w_ih_b"].T
    whh_b = params["w_hh_b"].T
    bih_f = params["b_ih_f"].reshape(1, 3 * H)
    bhh_f = params["b_hh_f"].reshape(1, 3 * H)
    bih_b = params["b_ih_b"].reshape(1, 3 * H)
    bhh_b = params["b_hh_b"].reshape(1, 3 * H)

    # Hoisted input projections: one big batched matmul per direction (glue);
    # only the h-dependent matmul remains on the serial path inside the kernel.
    gi_f = jnp.einsum("tbh,hg->tbg", emb, wih_f) + bih_f       # (T, B, 3H)
    gi_b = jnp.einsum("tbh,hg->tbg", emb, wih_b) + bih_b       # (T, B, 3H)

    wfc = params["w_fc"].T                                     # (2H, O)
    bfc = params["b_fc"].reshape(1, output_size)

    # At this size everything fits comfortably in VMEM; at production sizes,
    # stream gi over T with a grid / BlockSpec and shard batch across cores.
    vmem = pl.BlockSpec(memory_space=pltpu.MemorySpace.VMEM)
    return pl.pallas_call(
        rnn_classifier_kernel,
        out_shape=jax.ShapeDtypeStruct((B, output_size), jnp.float32),
        in_specs=[vmem] * 9,
        out_specs=vmem,
    )(gi_f, gi_b, lens, whh_f, bhh_f, whh_b, bhh_b, wfc, bfc)


# -------------------------- pure-JAX reference --------------------------------
def rnn_classifier_reference(tokens, seq_lengths, params, hidden_size, output_size):
    B, T = tokens.shape
    H = hidden_size
    emb = params["embedding"][tokens]            # (B, T, H)
    emb = jnp.transpose(emb, (1, 0, 2))          # (T, B, H)
    lens = seq_lengths.astype(jnp.int32).reshape(B, 1)

    def make_step(w_ih, w_hh, b_ih, b_hh):
        wir, wiz, win = jnp.split(w_ih, 3, axis=0)
        whr, whz, whn = jnp.split(w_hh, 3, axis=0)
        bir, biz, bin_ = jnp.split(b_ih, 3)
        bhr, bhz, bhn = jnp.split(b_hh, 3)

        def step(x, h):
            r = jax.nn.sigmoid(x @ wir.T + bir + h @ whr.T + bhr)
            z = jax.nn.sigmoid(x @ wiz.T + biz + h @ whz.T + bhz)
            n = jnp.tanh(x @ win.T + bin_ + r * (h @ whn.T + bhn))
            return (1.0 - z) * n + z * h
        return step

    step_f = make_step(params["w_ih_f"], params["w_hh_f"],
                       params["b_ih_f"], params["b_hh_f"])
    step_b = make_step(params["w_ih_b"], params["w_hh_b"],
                       params["b_ih_b"], params["b_hh_b"])

    h_f = jnp.zeros((B, H), jnp.float32)
    for t in range(T):
        h_f = jnp.where(lens > t, step_f(emb[t], h_f), h_f)

    h_b = jnp.zeros((B, H), jnp.float32)
    for t in range(T - 1, -1, -1):
        h_b = jnp.where(lens > t, step_b(emb[t], h_b), h_b)

    hidden_cat = jnp.concatenate([h_b, h_f], axis=1)
    return hidden_cat @ params["w_fc"].T + params["b_fc"]


# ---------------------------------- main --------------------------------------
if __name__ == "__main__":
    INPUT_SIZE = 20      # vocab size
    HIDDEN_SIZE = 32
    OUTPUT_SIZE = 4
    B, T = 4, 8

    key = jax.random.PRNGKey(0)
    k_tok, k_par = jax.random.split(key)

    tokens = jax.random.randint(k_tok, (B, T), 0, INPUT_SIZE, dtype=jnp.int32)
    # pack_padded_sequence requires lengths sorted descending
    seq_lengths = jnp.array([8, 7, 5, 3], dtype=jnp.int32)

    params = init_params(k_par, INPUT_SIZE, HIDDEN_SIZE, OUTPUT_SIZE)

    out = rnn_classifier_forward(tokens, seq_lengths, params, HIDDEN_SIZE, OUTPUT_SIZE)
    out = jax.block_until_ready(out)

    ref = rnn_classifier_reference(tokens, seq_lengths, params, HIDDEN_SIZE, OUTPUT_SIZE)
    assert out.shape == (B, OUTPUT_SIZE)
    assert jnp.allclose(out, ref, atol=1e-4, rtol=1e-4), (out, ref)

    print("KERNEL_OK")
</pallas_src>

<mosaic_0001>
module attributes {stable_mosaic.version = 11 : i64} {
  func.func @rnn_classifier_kernel(%arg0: memref<8x4x96xf32, #tpu.memory_space<vmem>>, %arg1: memref<8x4x96xf32, #tpu.memory_space<vmem>>, %arg2: memref<4x1xi32, #tpu.memory_space<vmem>>, %arg3: memref<32x96xf32, #tpu.memory_space<vmem>>, %arg4: memref<1x96xf32, #tpu.memory_space<vmem>>, %arg5: memref<32x96xf32, #tpu.memory_space<vmem>>, %arg6: memref<1x96xf32, #tpu.memory_space<vmem>>, %arg7: memref<64x4xf32, #tpu.memory_space<vmem>>, %arg8: memref<1x4xf32, #tpu.memory_space<vmem>>, %arg9: memref<4x4xf32, #tpu.memory_space<vmem>>) attributes {dimension_semantics = [], scalar_prefetch = 0 : i64, scratch_operands = 0 : i64, tpu.core_type = #tpu.core_type<tc>} {
    %c0 = arith.constant 0 : index
    %c0_0 = arith.constant 0 : index
    %0 = vector.load %arg2[%c0, %c0_0] : memref<4x1xi32, #tpu.memory_space<vmem>>, vector<4x1xi32>
    %c0_1 = arith.constant 0 : index
    %c0_2 = arith.constant 0 : index
    %1 = vector.load %arg3[%c0_1, %c0_2] : memref<32x96xf32, #tpu.memory_space<vmem>>, vector<32x96xf32>
    %c0_3 = arith.constant 0 : index
    %c0_4 = arith.constant 0 : index
    %2 = vector.load %arg4[%c0_3, %c0_4] : memref<1x96xf32, #tpu.memory_space<vmem>>, vector<1x96xf32>
    %c0_5 = arith.constant 0 : index
    %c0_6 = arith.constant 0 : index
    %3 = vector.load %arg5[%c0_5, %c0_6] : memref<32x96xf32, #tpu.memory_space<vmem>>, vector<32x96xf32>
    %c0_7 = arith.constant 0 : index
    %c0_8 = arith.constant 0 : index
    %4 = vector.load %arg6[%c0_7, %c0_8] : memref<1x96xf32, #tpu.memory_space<vmem>>, vector<1x96xf32>
    %cst = arith.constant 0.000000e+00 : f32
    %5 = vector.broadcast %cst : f32 to vector<4x32xf32>
    %c0_i32 = arith.constant 0 : i32
    %c7_i32 = arith.constant 7 : i32
    %6 = arith.subi %c7_i32, %c0_i32 : i32
    %7 = arith.index_cast %c0_i32 : i32 to index
    %c0_9 = arith.constant 0 : index
    %c0_10 = arith.constant 0 : index
    %8 = vector.load %arg0[%7, %c0_9, %c0_10] : memref<8x4x96xf32, #tpu.memory_space<vmem>>, vector<1x4x96xf32>
    %9 = vector.shape_cast %8 : vector<1x4x96xf32> to vector<4x96xf32>
    %cst_11 = arith.constant dense<0.000000e+00> : vector<4x96xf32>
    %10 = tpu.matmul %5, %1, %cst_11 {dimension_numbers = #tpu.dot_dimension_numbers<[1], [0], [0], [1], [0, 0, 1, 1], [], []>} : vector<4x32xf32>, vector<32x96xf32>, vector<4x96xf32> -> vector<4x96xf32>
    %11 = vector.broadcast %2 : vector<1x96xf32> to vector<4x96xf32>
    %12 = arith.addf %10, %11 : vector<4x96xf32>
    %13 = vector.extract_strided_slice %9 {offsets = [0, 0], sizes = [4, 32], strides = [1, 1]} : vector<4x96xf32> to vector<4x32xf32>
    %14 = vector.extract_strided_slice %12 {offsets = [0, 0], sizes = [4, 32], strides = [1, 1]} : vector<4x96xf32> to vector<4x32xf32>
    %15 = arith.addf %13, %14 : vector<4x32xf32>
    %16 = arith.negf %15 : vector<4x32xf32>
    %17 = math.exp %16 : vector<4x32xf32>
    %cst_12 = arith.constant 1.000000e+00 : f32
    %18 = vector.broadcast %cst_12 : f32 to vector<4x32xf32>
    %19 = arith.addf %18, %17 : vector<4x32xf32>
    %20 = arith.divf %18, %19 : vector<4x32xf32>
    %21 = vector.extract_strided_slice %9 {offsets = [0, 32], sizes = [4, 32], strides = [1, 1]} : vector<4x96xf32> to vector<4x32xf32>
    %22 = vector.extract_strided_slice %12 {offsets = [0, 32], sizes = [4, 32], strides = [1, 1]} : vector<4x96xf32> to vector<4x32xf32>
    %23 = arith.addf %21, %22 : vector<4x32xf32>
    %24 = arith.negf %23 : vector<4x32xf32>
    %25 = math.exp %24 : vector<4x32xf32>
    %cst_13 = arith.constant 1.000000e+00 : f32
    %26 = vector.broadcast %cst_13 : f32 to vector<4x32xf32>
    %27 = arith.addf %26, %25 : vector<4x32xf32>
    %28 = arith.divf %26, %27 : vector<4x32xf32>
    %29 = vector.extract_strided_slice %9 {offsets = [0, 64], sizes = [4, 32], strides = [1, 1]} : vector<4x96xf32> to vector<4x32xf32>
    %30 = vector.extract_strided_slice %12 {offsets = [0, 64], sizes = [4, 32], strides = [1, 1]} : vector<4x96xf32> to vector<4x32xf32>
    %31 = arith.mulf %20, %30 : vector<4x32xf32>
    %32 = arith.addf %29, %31 : vector<4x32xf32>
    %33 = math.tanh %32 : vector<4x32xf32>
    %cst_14 = arith.constant 1.000000e+00 : f32
    %34 = vector.broadcast %cst_14 : f32 to vector<4x32xf32>
    %35 = arith.subf %34, %28 : vector<4x32xf32>
    %36 = arith.mulf %35, %33 : vector<4x32xf32>
    %37 = arith.mulf %28, %5 : vector<4x32xf32>
    %38 = arith.addf %36, %37 : vector<4x32xf32>
    %39 = vector.broadcast %c0_i32 : i32 to vector<4x1xi32>
    %40 = arith.cmpi sgt, %0, %39 : vector<4x1xi32>
    %41 = vector.shape_cast %40 : vector<4x1xi1> to vector<4x1xi1>
    %42 = vector.broadcast %41 : vector<4x1xi1> to vector<4x32xi1>
    %43 = arith.select %42, %38, %5 : vector<4x32xi1>, vector<4x32xf32>
    %44 = arith.index_cast %6 : i32 to index
    %c0_15 = arith.constant 0 : index
    %c0_16 = arith.constant 0 : index
    %45 = vector.load %arg1[%44, %c0_15, %c0_16] : memref<8x4x96xf32, #tpu.memory_space<vmem>>, vector<1x4x96xf32>
    %46 = vector.shape_cast %45 : vector<1x4x96xf32> to vector<4x96xf32>
    %cst_17 = arith.constant dense<0.000000e+00> : vector<4x96xf32>
    %47 = tpu.matmul %5, %3, %cst_17 {dimension_numbers = #tpu.dot_dimension_numbers<[1], [0], [0], [1], [0, 0, 1, 1], [], []>} : vector<4x32xf32>, vector<32x96xf32>, vector<4x96xf32> -> vector<4x96xf32>
    %48 = vector.broadcast %4 : vector<1x96xf32> to vector<4x96xf32>
    %49 = arith.addf %47, %48 : vector<4x96xf32>
    %50 = vector.extract_strided_slice %46 {offsets = [0, 0], sizes = [4, 32], strides = [1, 1]} : vector<4x96xf32> to vector<4x32xf32>
    %51 = vector.extract_strided_slice %49 {offsets = [0, 0], sizes = [4, 32], strides = [1, 1]} : vector<4x96xf32> to vector<4x32xf32>
    %52 = arith.addf %50, %51 : vector<4x32xf32>
    %53 = arith.negf %52 : vector<4x32xf32>
    %54 = math.exp %53 : vector<4x32xf32>
    %cst_18 = arith.constant 1.000000e+00 : f32
    %55 = vector.broadcast %cst_18 : f32 to vector<4x32xf32>
    %56 = arith.addf %55, %54 : vector<4x32xf32>
    %57 = arith.divf %55, %56 : vector<4x32xf32>
    %58 = vector.extract_strided_slice %46 {offsets = [0, 32], sizes = [4, 32], strides = [1, 1]} : vector<4x96xf32> to vector<4x32xf32>
    %59 = vector.extract_strided_slice %49 {offsets = [0, 32], sizes = [4, 32], strides = [1, 1]} : vector<4x96xf32> to vector<4x32xf32>
    %60 = arith.addf %58, %59 : vector<4x32xf32>
    %61 = arith.negf %60 : vector<4x32xf32>
    %62 = math.exp %61 : vector<4x32xf32>
    %cst_19 = arith.constant 1.000000e+00 : f32
    %63 = vector.broadcast %cst_19 : f32 to vector<4x32xf32>
    %64 = arith.addf %63, %62 : vector<4x32xf32>
    %65 = arith.divf %63, %64 : vector<4x32xf32>
    %66 = vector.extract_strided_slice %46 {offsets = [0, 64], sizes = [4, 32], strides = [1, 1]} : vector<4x96xf32> to vector<4x32xf32>
    %67 = vector.extract_strided_slice %49 {offsets = [0, 64], sizes = [4, 32], strides = [1, 1]} : vector<4x96xf32> to vector<4x32xf32>
    %68 = arith.mulf %57, %67 : vector<4x32xf32>
    %69 = arith.addf %66, %68 : vector<4x32xf32>
    %70 = math.tanh %69 : vector<4x32xf32>
    %cst_20 = arith.constant 1.000000e+00 : f32
    %71 = vector.broadcast %cst_20 : f32 to vector<4x32xf32>
    %72 = arith.subf %71, %65 : vector<4x32xf32>
    %73 = arith.mulf %72, %70 : vector<4x32xf32>
    %74 = arith.mulf %65, %5 : vector<4x32xf32>
    %75 = arith.addf %73, %74 : vector<4x32xf32>
    %76 = vector.broadcast %6 : i32 to vector<4x1xi32>
    %77 = arith.cmpi sgt, %0, %76 : vector<4x1xi32>
    %78 = vector.shape_cast %77 : vector<4x1xi1> to vector<4x1xi1>
    %79 = vector.broadcast %78 : vector<4x1xi1> to vector<4x32xi1>
    %80 = arith.select %79, %75, %5 : vector<4x32xi1>, vector<4x32xf32>
    %c1_i32 = arith.constant 1 : i32
    %c7_i32_21 = arith.constant 7 : i32
    %81 = arith.subi %c7_i32_21, %c1_i32 : i32
    %82 = arith.index_cast %c1_i32 : i32 to index
    %c0_22 = arith.constant 0 : index
    %c0_23 = arith.constant 0 : index
    %83 = vector.load %arg0[%82, %c0_22, %c0_23] : memref<8x4x96xf32, #tpu.memory_space<vmem>>, vector<1x4x96xf32>
    %84 = vector.shape_cast %83 : vector<1x4x96xf32> to vector<4x96xf32>
    %cst_24 = arith.constant dense<0.000000e+00> : vector<4x96xf32>
    %85 = tpu.matmul %43, %1, %cst_24 {dimension_numbers = #tpu.dot_dimension_numbers<[1], [0], [0], [1], [0, 0, 1, 1], [], []>} : vector<4x32xf32>, vector<32x96xf32>, vector<4x96xf32> -> vector<4x96xf32>
    %86 = vector.broadcast %2 : vector<1x96xf32> to vector<4x96xf32>
    %87 = arith.addf %85, %86 : vector<4x96xf32>
    %88 = vector.extract_strided_slice %84 {offsets = [0, 0], sizes = [4, 32], strides = [1, 1]} : vector<4x96xf32> to vector<4x32xf32>
    %89 = vector.extract_strided_slice %87 {offsets = [0, 0], sizes = [4, 32], strides = [1, 1]} : vector<4x96xf32> to vector<4x32xf32>
    %90 = arith.addf %88, %89 : vector<4x32xf32>
    %91 = arith.negf %90 : vector<4x32xf32>
    %92 = math.exp %91 : vector<4x32xf32>
    %cst_25 = arith.constant 1.000000e+00 : f32
    %93 = vector.broadcast %cst_25 : f32 to vector<4x32xf32>
    %94 = arith.addf %93, %92 : vector<4x32xf32>
    %95 = arith.divf %93, %94 : vector<4x32xf32>
    %96 = vector.extract_strided_slice %84 {offsets = [0, 32], sizes = [4, 32], strides = [1, 1]} : vector<4x96xf32> to vector<4x32xf32>
    %97 = vector.extract_strided_slice %87 {offsets = [0, 32], sizes = [4, 32], strides = [1, 1]} : vector<4x96xf32> to vector<4x32xf32>
    %98 = arith.addf %96, %97 : vector<4x32xf32>
    %99 = arith.negf %98 : vector<4x32xf32>
    %100 = math.exp %99 : vector<4x32xf32>
    %cst_26 = arith.constant 1.000000e+00 : f32
    %101 = vector.broadcast %cst_26 : f32 to vector<4x32xf32>
    %102 = arith.addf %101, %100 : vector<4x32xf32>
    %103 = arith.divf %101, %102 : vector<4x32xf32>
    %104 = vector.extract_strided_slice %84 {offsets = [0, 64], sizes = [4, 32], strides = [1, 1]} : vector<4x96xf32> to vector<4x32xf32>
    %105 = vector.extract_strided_slice %87 {offsets = [0, 64], sizes = [4, 32], strides = [1, 1]} : vector<4x96xf32> to vector<4x32xf32>
    %106 = arith.mulf %95, %105 : vector<4x32xf32>
    %107 = arith.addf %104, %106 : vector<4x32xf32>
    %108 = math.tanh %107 : vector<4x32xf32>
    %cst_27 = arith.constant 1.000000e+00 : f32
    %109 = vector.broadcast %cst_27 : f32 to vector<4x32xf32>
    %110 = arith.subf %109, %103 : vector<4x32xf32>
    %111 = arith.mulf %110, %108 : vector<4x32xf32>
    %112 = arith.mulf %103, %43 : vector<4x32xf32>
    %113 = arith.addf %111, %112 : vector<4x32xf32>
    %114 = vector.broadcast %c1_i32 : i32 to vector<4x1xi32>
    %115 = arith.cmpi sgt, %0, %114 : vector<4x1xi32>
    %116 = vector.shape_cast %115 : vector<4x1xi1> to vector<4x1xi1>
    %117 = vector.broadcast %116 : vector<4x1xi1> to vector<4x32xi1>
    %118 = arith.select %117, %113, %43 : vector<4x32xi1>, vector<4x32xf32>
    %119 = arith.index_cast %81 : i32 to index
    %c0_28 = arith.constant 0 : index
    %c0_29 = arith.constant 0 : index
    %120 = vector.load %arg1[%119, %c0_28, %c0_29] : memref<8x4x96xf32, #tpu.memory_space<vmem>>, vector<1x4x96xf32>
    %121 = vector.shape_cast %120 : vector<1x4x96xf32> to vector<4x96xf32>
    %cst_30 = arith.constant dense<0.000000e+00> : vector<4x96xf32>
    %122 = tpu.matmul %80, %3, %cst_30 {dimension_numbers = #tpu.dot_dimension_numbers<[1], [0], [0], [1], [0, 0, 1, 1], [], []>} : vector<4x32xf32>, vector<32x96xf32>, vector<4x96xf32> -> vector<4x96xf32>
    %123 = vector.broadcast %4 : vector<1x96xf32> to vector<4x96xf32>
    %124 = arith.addf %122, %123 : vector<4x96xf32>
    %125 = vector.extract_strided_slice %121 {offsets = [0, 0], sizes = [4, 32], strides = [1, 1]} : vector<4x96xf32> to vector<4x32xf32>
    %126 = vector.extract_strided_slice %124 {offsets = [0, 0], sizes = [4, 32], strides = [1, 1]} : vector<4x96xf32> to vector<4x32xf32>
    %127 = arith.addf %125, %126 : vector<4x32xf32>
    %128 = arith.negf %127 : vector<4x32xf32>
    %129 = math.exp %128 : vector<4x32xf32>
    %cst_31 = arith.constant 1.000000e+00 : f32
    %130 = vector.broadcast %cst_31 : f32 to vector<4x32xf32>
    %131 = arith.addf %130, %129 : vector<4x32xf32>
    %132 = arith.divf %130, %131 : vector<4x32xf32>
    %133 = vector.extract_strided_slice %121 {offsets = [0, 32], sizes = [4, 32], strides = [1, 1]} : vector<4x96xf32> to vector<4x32xf32>
    %134 = vector.extract_strided_slice %124 {offsets = [0, 32], sizes = [4, 32], strides = [1, 1]} : vector<4x96xf32> to vector<4x32xf32>
    %135 = arith.addf %133, %134 : vector<4x32xf32>
    %136 = arith.negf %135 : vector<4x32xf32>
    %137 = math.exp %136 : vector<4x32xf32>
    %cst_32 = arith.constant 1.000000e+00 : f32
    %138 = vector.broadcast %cst_32 : f32 to vector<4x32xf32>
    %139 = arith.addf %138, %137 : vector<4x32xf32>
    %140 = arith.divf %138, %139 : vector<4x32xf32>
    %141 = vector.extract_strided_slice %121 {offsets = [0, 64], sizes = [4, 32], strides = [1, 1]} : vector<4x96xf32> to vector<4x32xf32>
    %142 = vector.extract_strided_slice %124 {offsets = [0, 64], sizes = [4, 32], strides = [1, 1]} : vector<4x96xf32> to vector<4x32xf32>
    %143 = arith.mulf %132, %142 : vector<4x32xf32>
    %144 = arith.addf %141, %143 : vector<4x32xf32>
    %145 = math.tanh %144 : vector<4x32xf32>
    %cst_33 = arith.constant 1.000000e+00 : f32
    %146 = vector.broadcast %cst_33 : f32 to vector<4x32xf32>
    %147 = arith.subf %146, %140 : vector<4x32xf32>
    %148 = arith.mulf %147, %145 : vector<4x32xf32>
    %149 = arith.mulf %140, %80 : vector<4x32xf32>
    %150 = arith.addf %148, %149 : vector<4x32xf32>
    %151 = vector.broadcast %81 : i32 to vector<4x1xi32>
    %152 = arith.cmpi sgt, %0, %151 : vector<4x1xi32>
    %153 = vector.shape_cast %152 : vector<4x1xi1> to vector<4x1xi1>
    %154 = vector.broadcast %153 : vector<4x1xi1> to vector<4x32xi1>
    %155 = arith.select %154, %150, %80 : vector<4x32xi1>, vector<4x32xf32>
    %c2_i32 = arith.constant 2 : i32
    %c7_i32_34 = arith.constant 7 : i32
    %156 = arith.subi %c7_i32_34, %c2_i32 : i32
    %157 = arith.index_cast %c2_i32 : i32 to index
    %c0_35 = arith.constant 0 : index
    %c0_36 = arith.constant 0 : index
    %158 = vector.load %arg0[%157, %c0_35, %c0_36] : memref<8x4x96xf32, #tpu.memory_space<vmem>>, vector<1x4x96xf32>
    %159 = vector.shape_cast %158 : vector<1x4x96xf32> to vector<4x96xf32>
    %cst_37 = arith.constant dense<0.000000e+00> : vector<4x96xf32>
    %160 = tpu.matmul %118, %1, %cst_37 {dimension_numbers = #tpu.dot_dimension_numbers<[1], [0], [0], [1], [0, 0, 1, 1], [], []>} : vector<4x32xf32>, vector<32x96xf32>, vector<4x96xf32> -> vector<4x96xf32>
    %161 = vector.broadcast %2 : vector<1x96xf32> to vector<4x96xf32>
    %162 = arith.addf %160, %161 : vector<4x96xf32>
    %163 = vector.extract_strided_slice %159 {offsets = [0, 0], sizes = [4, 32], strides = [1, 1]} : vector<4x96xf32> to vector<4x32xf32>
    %164 = vector.extract_strided_slice %162 {offsets = [0, 0], sizes = [4, 32], strides = [1, 1]} : vector<4x96xf32> to vector<4x32xf32>
    %165 = arith.addf %163, %164 : vector<4x32xf32>
    %166 = arith.negf %165 : vector<4x32xf32>
    %167 = math.exp %166 : vector<4x32xf32>
    %cst_38 = arith.constant 1.000000e+00 : f32
    %168 = vector.broadcast %cst_38 : f32 to vector<4x32xf32>
    %169 = arith.addf %168, %167 : vector<4x32xf32>
    %170 = arith.divf %168, %169 : vector<4x32xf32>
    %171 = vector.extract_strided_slice %159 {offsets = [0, 32], sizes = [4, 32], strides = [1, 1]} : vector<4x96xf32> to vector<4x32xf32>
    %172 = vector.extract_strided_slice %162 {offsets = [0, 32], sizes = [4, 32], strides = [1, 1]} : vector<4x96xf32> to vector<4x32xf32>
    %173 = arith.addf %171, %172 : vector<4x32xf32>
    %174 = arith.negf %173 : vector<4x32xf32>
    %175 = math.exp %174 : vector<4x32xf32>
    %cst_39 = arith.constant 1.000000e+00 : f32
    %176 = vector.broadcast %cst_39 : f32 to vector<4x32xf32>
    %177 = arith.addf %176, %175 : vector<4x32xf32>
    %178 = arith.divf %176, %177 : vector<4x32xf32>
    %179 = vector.extract_strided_slice %159 {offsets = [0, 64], sizes = [4, 32], strides = [1, 1]} : vector<4x96xf32> to vector<4x32xf32>
    %180 = vector.extract_strided_slice %162 {offsets = [0, 64], sizes = [4, 32], strides = [1, 1]} : vector<4x96xf32> to vector<4x32xf32>
    %181 = arith.mulf %170, %180 : vector<4x32xf32>
    %182 = arith.addf %179, %181 : vector<4x32xf32>
    %183 = math.tanh %182 : vector<4x32xf32>
    %cst_40 = arith.constant 1.000000e+00 : f32
    %184 = vector.broadcast %cst_40 : f32 to vector<4x32xf32>
    %185 = arith.subf %184, %178 : vector<4x32xf32>
    %186 = arith.mulf %185, %183 : vector<4x32xf32>
    %187 = arith.mulf %178, %118 : vector<4x32xf32>
    %188 = arith.addf %186, %187 : vector<4x32xf32>
    %189 = vector.broadcast %c2_i32 : i32 to vector<4x1xi32>
    %190 = arith.cmpi sgt, %0, %189 : vector<4x1xi32>
    %191 = vector.shape_cast %190 : vector<4x1xi1> to vector<4x1xi1>
    %192 = vector.broadcast %191 : vector<4x1xi1> to vector<4x32xi1>
    %193 = arith.select %192, %188, %118 : vector<4x32xi1>, vector<4x32xf32>
    %194 = arith.index_cast %156 : i32 to index
    %c0_41 = arith.constant 0 : index
    %c0_42 = arith.constant 0 : index
    %195 = vector.load %arg1[%194, %c0_41, %c0_42] : memref<8x4x96xf32, #tpu.memory_space<vmem>>, vector<1x4x96xf32>
    %196 = vector.shape_cast %195 : vector<1x4x96xf32> to vector<4x96xf32>
    %cst_43 = arith.constant dense<0.000000e+00> : vector<4x96xf32>
    %197 = tpu.matmul %155, %3, %cst_43 {dimension_numbers = #tpu.dot_dimension_numbers<[1], [0], [0], [1], [0, 0, 1, 1], [], []>} : vector<4x32xf32>, vector<32x96xf32>, vector<4x96xf32> -> vector<4x96xf32>
    %198 = vector.broadcast %4 : vector<1x96xf32> to vector<4x96xf32>
    %199 = arith.addf %197, %198 : vector<4x96xf32>
    %200 = vector.extract_strided_slice %196 {offsets = [0, 0], sizes = [4, 32], strides = [1, 1]} : vector<4x96xf32> to vector<4x32xf32>
    %201 = vector.extract_strided_slice %199 {offsets = [0, 0], sizes = [4, 32], strides = [1, 1]} : vector<4x96xf32> to vector<4x32xf32>
    %202 = arith.addf %200, %201 : vector<4x32xf32>
    %203 = arith.negf %202 : vector<4x32xf32>
    %204 = math.exp %203 : vector<4x32xf32>
    %cst_44 = arith.constant 1.000000e+00 : f32
    %205 = vector.broadcast %cst_44 : f32 to vector<4x32xf32>
    %206 = arith.addf %205, %204 : vector<4x32xf32>
    %207 = arith.divf %205, %206 : vector<4x32xf32>
    %208 = vector.extract_strided_slice %196 {offsets = [0, 32], sizes = [4, 32], strides = [1, 1]} : vector<4x96xf32> to vector<4x32xf32>
    %209 = vector.extract_strided_slice %199 {offsets = [0, 32], sizes = [4, 32], strides = [1, 1]} : vector<4x96xf32> to vector<4x32xf32>
    %210 = arith.addf %208, %209 : vector<4x32xf32>
    %211 = arith.negf %210 : vector<4x32xf32>
    %212 = math.exp %211 : vector<4x32xf32>
    %cst_45 = arith.constant 1.000000e+00 : f32
    %213 = vector.broadcast %cst_45 : f32 to vector<4x32xf32>
    %214 = arith.addf %213, %212 : vector<4x32xf32>
    %215 = arith.divf %213, %214 : vector<4x32xf32>
    %216 = vector.extract_strided_slice %196 {offsets = [0, 64], sizes = [4, 32], strides = [1, 1]} : vector<4x96xf32> to vector<4x32xf32>
    %217 = vector.extract_strided_slice %199 {offsets = [0, 64], sizes = [4, 32], strides = [1, 1]} : vector<4x96xf32> to vector<4x32xf32>
    %218 = arith.mulf %207, %217 : vector<4x32xf32>
    %219 = arith.addf %216, %218 : vector<4x32xf32>
    %220 = math.tanh %219 : vector<4x32xf32>
    %cst_46 = arith.constant 1.000000e+00 : f32
    %221 = vector.broadcast %cst_46 : f32 to vector<4x32xf32>
    %222 = arith.subf %221, %215 : vector<4x32xf32>
    %223 = arith.mulf %222, %220 : vector<4x32xf32>
    %224 = arith.mulf %215, %155 : vector<4x32xf32>
    %225 = arith.addf %223, %224 : vector<4x32xf32>
    %226 = vector.broadcast %156 : i32 to vector<4x1xi32>
    %227 = arith.cmpi sgt, %0, %226 : vector<4x1xi32>
    %228 = vector.shape_cast %227 : vector<4x1xi1> to vector<4x1xi1>
    %229 = vector.broadcast %228 : vector<4x1xi1> to vector<4x32xi1>
    %230 = arith.select %229, %225, %155 : vector<4x32xi1>, vector<4x32xf32>
    %c3_i32 = arith.constant 3 : i32
    %c7_i32_47 = arith.constant 7 : i32
    %231 = arith.subi %c7_i32_47, %c3_i32 : i32
    %232 = arith.index_cast %c3_i32 : i32 to index
    %c0_48 = arith.constant 0 : index
    %c0_49 = arith.constant 0 : index
    %233 = vector.load %arg0[%232, %c0_48, %c0_49] : memref<8x4x96xf32, #tpu.memory_space<vmem>>, vector<1x4x96xf32>
    %234 = vector.shape_cast %233 : vector<1x4x96xf32> to vector<4x96xf32>
    %cst_50 = arith.constant dense<0.000000e+00> : vector<4x96xf32>
    %235 = tpu.matmul %193, %1, %cst_50 {dimension_numbers = #tpu.dot_dimension_numbers<[1], [0], [0], [1], [0, 0, 1, 1], [], []>} : vector<4x32xf32>, vector<32x96xf32>, vector<4x96xf32> -> vector<4x96xf32>
    %236 = vector.broadcast %2 : vector<1x96xf32> to vector<4x96xf32>
    %237 = arith.addf %235, %236 : vector<4x96xf32>
    %238 = vector.extract_strided_slice %234 {offsets = [0, 0], sizes = [4, 32], strides = [1, 1]} : vector<4x96xf32> to vector<4x32xf32>
    %239 = vector.extract_strided_slice %237 {offsets = [0, 0], sizes = [4, 32], strides = [1, 1]} : vector<4x96xf32> to vector<4x32xf32>
    %240 = arith.addf %238, %239 : vector<4x32xf32>
    %241 = arith.negf %240 : vector<4x32xf32>
    %242 = math.exp %241 : vector<4x32xf32>
    %cst_51 = arith.constant 1.000000e+00 : f32
    %243 = vector.broadcast %cst_51 : f32 to vector<4x32xf32>
    %244 = arith.addf %243, %242 : vector<4x32xf32>
    %245 = arith.divf %243, %244 : vector<4x32xf32>
    %246 = vector.extract_strided_slice %234 {offsets = [0, 32], sizes = [4, 32], strides = [1, 1]} : vector<4x96xf32> to vector<4x32xf32>
    %247 = vector.extract_strided_slice %237 {offsets = [0, 32], sizes = [4, 32], strides = [1, 1]} : vector<4x96xf32> to vector<4x32xf32>
    %248 = arith.addf %246, %247 : vector<4x32xf32>
    %249 = arith.negf %248 : vector<4x32xf32>
    %250 = math.exp %249 : vector<4x32xf32>
    %cst_52 = arith.constant 1.000000e+00 : f32
    %251 = vector.broadcast %cst_52 : f32 to vector<4x32xf32>
    %252 = arith.addf %251, %250 : vector<4x32xf32>
    %253 = arith.divf %251, %252 : vector<4x32xf32>
    %254 = vector.extract_strided_slice %234 {offsets = [0, 64], sizes = [4, 32], strides = [1, 1]} : vector<4x96xf32> to vector<4x32xf32>
    %255 = vector.extract_strided_slice %237 {offsets = [0, 64], sizes = [4, 32], strides = [1, 1]} : vector<4x96xf32> to vector<4x32xf32>
    %256 = arith.mulf %245, %255 : vector<4x32xf32>
    %257 = arith.addf %254, %256 : vector<4x32xf32>
    %258 = math.tanh %257 : vector<4x32xf32>
    %cst_53 = arith.constant 1.000000e+00 : f32
    %259 = vector.broadcast %cst_53 : f32 to vector<4x32xf32>
    %260 = arith.subf %259, %253 : vector<4x32xf32>
    %261 = arith.mulf %260, %258 : vector<4x32xf32>
    %262 = arith.mulf %253, %193 : vector<4x32xf32>
    %263 = arith.addf %261, %262 : vector<4x32xf32>
    %264 = vector.broadcast %c3_i32 : i32 to vector<4x1xi32>
    %265 = arith.cmpi sgt, %0, %264 : vector<4x1xi32>
    %266 = vector.shape_cast %265 : vector<4x1xi1> to vector<4x1xi1>
    %267 = vector.broadcast %266 : vector<4x1xi1> to vector<4x32xi1>
    %268 = arith.select %267, %263, %193 : vector<4x32xi1>, vector<4x32xf32>
    %269 = arith.index_cast %231 : i32 to index
    %c0_54 = arith.constant 0 : index
    %c0_55 = arith.constant 0 : index
    %270 = vector.load %arg1[%269, %c0_54, %c0_55] : memref<8x4x96xf32, #tpu.memory_space<vmem>>, vector<1x4x96xf32>
    %271 = vector.shape_cast %270 : vector<1x4x96xf32> to vector<4x96xf32>
    %cst_56 = arith.constant dense<0.000000e+00> : vector<4x96xf32>
    %272 = tpu.matmul %230, %3, %cst_56 {dimension_numbers = #tpu.dot_dimension_numbers<[1], [0], [0], [1], [0, 0, 1, 1], [], []>} : vector<4x32xf32>, vector<32x96xf32>, vector<4x96xf32> -> vector<4x96xf32>
    %273 = vector.broadcast %4 : vector<1x96xf32> to vector<4x96xf32>
    %274 = arith.addf %272, %273 : vector<4x96xf32>
    %275 = vector.extract_strided_slice %271 {offsets = [0, 0], sizes = [4, 32], strides = [1, 1]} : vector<4x96xf32> to vector<4x32xf32>
    %276 = vector.extract_strided_slice %274 {offsets = [0, 0], sizes = [4, 32], strides = [1, 1]} : vector<4x96xf32> to vector<4x32xf32>
    %277 = arith.addf %275, %276 : vector<4x32xf32>
    %278 = arith.negf %277 : vector<4x32xf32>
    %279 = math.exp %278 : vector<4x32xf32>
    %cst_57 = arith.constant 1.000000e+00 : f32
    %280 = vector.broadcast %cst_57 : f32 to vector<4x32xf32>
    %281 = arith.addf %280, %279 : vector<4x32xf32>
    %282 = arith.divf %280, %281 : vector<4x32xf32>
    %283 = vector.extract_strided_slice %271 {offsets = [0, 32], sizes = [4, 32], strides = [1, 1]} : vector<4x96xf32> to vector<4x32xf32>
    %284 = vector.extract_strided_slice %274 {offsets = [0, 32], sizes = [4, 32], strides = [1, 1]} : vector<4x96xf32> to vector<4x32xf32>
    %285 = arith.addf %283, %284 : vector<4x32xf32>
    %286 = arith.negf %285 : vector<4x32xf32>
    %287 = math.exp %286 : vector<4x32xf32>
    %cst_58 = arith.constant 1.000000e+00 : f32
    %288 = vector.broadcast %cst_58 : f32 to vector<4x32xf32>
    %289 = arith.addf %288, %287 : vector<4x32xf32>
    %290 = arith.divf %288, %289 : vector<4x32xf32>
    %291 = vector.extract_strided_slice %271 {offsets = [0, 64], sizes = [4, 32], strides = [1, 1]} : vector<4x96xf32> to vector<4x32xf32>
    %292 = vector.extract_strided_slice %274 {offsets = [0, 64], sizes = [4, 32], strides = [1, 1]} : vector<4x96xf32> to vector<4x32xf32>
    %293 = arith.mulf %282, %292 : vector<4x32xf32>
    %294 = arith.addf %291, %293 : vector<4x32xf32>
    %295 = math.tanh %294 : vector<4x32xf32>
    %cst_59 = arith.constant 1.000000e+00 : f32
    %296 = vector.broadcast %cst_59 : f32 to vector<4x32xf32>
    %297 = arith.subf %296, %290 : vector<4x32xf32>
    %298 = arith.mulf %297, %295 : vector<4x32xf32>
    %299 = arith.mulf %290, %230 : vector<4x32xf32>
    %300 = arith.addf %298, %299 : vector<4x32xf32>
    %301 = vector.broadcast %231 : i32 to vector<4x1xi32>
    %302 = arith.cmpi sgt, %0, %301 : vector<4x1xi32>
    %303 = vector.shape_cast %302 : vector<4x1xi1> to vector<4x1xi1>
    %304 = vector.broadcast %303 : vector<4x1xi1> to vector<4x32xi1>
    %305 = arith.select %304, %300, %230 : vector<4x32xi1>, vector<4x32xf32>
    %c4_i32 = arith.constant 4 : i32
    %c7_i32_60 = arith.constant 7 : i32
    %306 = arith.subi %c7_i32_60, %c4_i32 : i32
    %307 = arith.index_cast %c4_i32 : i32 to index
    %c0_61 = arith.constant 0 : index
    %c0_62 = arith.constant 0 : index
    %308 = vector.load %arg0[%307, %c0_61, %c0_62] : memref<8x4x96xf32, #tpu.memory_space<vmem>>, vector<1x4x96xf32>
    %309 = vector.shape_cast %308 : vector<1x4x96xf32> to vector<4x96xf32>
    %cst_63 = arith.constant dense<0.000000e+00> : vector<4x96xf32>
    %310 = tpu.matmul %268, %1, %cst_63 {dimension_numbers = #tpu.dot_dimension_numbers<[1], [0], [0], [1], [0, 0, 1, 1], [], []>} : vector<4x32xf32>, vector<32x96xf32>, vector<4x96xf32> -> vector<4x96xf32>
    %311 = vector.broadcast %2 : vector<1x96xf32> to vector<4x96xf32>
    %312 = arith.addf %310, %311 : vector<4x96xf32>
    %313 = vector.extract_strided_slice %309 {offsets = [0, 0], sizes = [4, 32], strides = [1, 1]} : vector<4x96xf32> to vector<4x32xf32>
    %314 = vector.extract_strided_slice %312 {offsets = [0, 0], sizes = [4, 32], strides = [1, 1]} : vector<4x96xf32> to vector<4x32xf32>
    %315 = arith.addf %313, %314 : vector<4x32xf32>
    %316 = arith.negf %315 : vector<4x32xf32>
    %317 = math.exp %316 : vector<4x32xf32>
    %cst_64 = arith.constant 1.000000e+00 : f32
    %318 = vector.broadcast %cst_64 : f32 to vector<4x32xf32>
    %319 = arith.addf %318, %317 : vector<4x32xf32>
    %320 = arith.divf %318, %319 : vector<4x32xf32>
    %321 = vector.extract_strided_slice %309 {offsets = [0, 32], sizes = [4, 32], strides = [1, 1]} : vector<4x96xf32> to vector<4x32xf32>
    %322 = vector.extract_strided_slice %312 {offsets = [0, 32], sizes = [4, 32], strides = [1, 1]} : vector<4x96xf32> to vector<4x32xf32>
    %323 = arith.addf %321, %322 : vector<4x32xf32>
    %324 = arith.negf %323 : vector<4x32xf32>
    %325 = math.exp %324 : vector<4x32xf32>
    %cst_65 = arith.constant 1.000000e+00 : f32
    %326 = vector.broadcast %cst_65 : f32 to vector<4x32xf32>
    %327 = arith.addf %326, %325 : vector<4x32xf32>
    %328 = arith.divf %326, %327 : vector<4x32xf32>
    %329 = vector.extract_strided_slice %309 {offsets = [0, 64], sizes = [4, 32], strides = [1, 1]} : vector<4x96xf32> to vector<4x32xf32>
    %330 = vector.extract_strided_slice %312 {offsets = [0, 64], sizes = [4, 32], strides = [1, 1]} : vector<4x96xf32> to vector<4x32xf32>
    %331 = arith.mulf %320, %330 : vector<4x32xf32>
    %332 = arith.addf %329, %331 : vector<4x32xf32>
    %333 = math.tanh %332 : vector<4x32xf32>
    %cst_66 = arith.constant 1.000000e+00 : f32
    %334 = vector.broadcast %cst_66 : f32 to vector<4x32xf32>
    %335 = arith.subf %334, %328 : vector<4x32xf32>
    %336 = arith.mulf %335, %333 : vector<4x32xf32>
    %337 = arith.mulf %328, %268 : vector<4x32xf32>
    %338 = arith.addf %336, %337 : vector<4x32xf32>
    %339 = vector.broadcast %c4_i32 : i32 to vector<4x1xi32>
    %340 = arith.cmpi sgt, %0, %339 : vector<4x1xi32>
    %341 = vector.shape_cast %340 : vector<4x1xi1> to vector<4x1xi1>
    %342 = vector.broadcast %341 : vector<4x1xi1> to vector<4x32xi1>
    %343 = arith.select %342, %338, %268 : vector<4x32xi1>, vector<4x32xf32>
    %344 = arith.index_cast %306 : i32 to index
    %c0_67 = arith.constant 0 : index
    %c0_68 = arith.constant 0 : index
    %345 = vector.load %arg1[%344, %c0_67, %c0_68] : memref<8x4x96xf32, #tpu.memory_space<vmem>>, vector<1x4x96xf32>
    %346 = vector.shape_cast %345 : vector<1x4x96xf32> to vector<4x96xf32>
    %cst_69 = arith.constant dense<0.000000e+00> : vector<4x96xf32>
    %347 = tpu.matmul %305, %3, %cst_69 {dimension_numbers = #tpu.dot_dimension_numbers<[1], [0], [0], [1], [0, 0, 1, 1], [], []>} : vector<4x32xf32>, vector<32x96xf32>, vector<4x96xf32> -> vector<4x96xf32>
    %348 = vector.broadcast %4 : vector<1x96xf32> to vector<4x96xf32>
    %349 = arith.addf %347, %348 : vector<4x96xf32>
    %350 = vector.extract_strided_slice %346 {offsets = [0, 0], sizes = [4, 32], strides = [1, 1]} : vector<4x96xf32> to vector<4x32xf32>
    %351 = vector.extract_strided_slice %349 {offsets = [0, 0], sizes = [4, 32], strides = [1, 1]} : vector<4x96xf32> to vector<4x32xf32>
    %352 = arith.addf %350, %351 : vector<4x32xf32>
    %353 = arith.negf %352 : vector<4x32xf32>
    %354 = math.exp %353 : vector<4x32xf32>
    %cst_70 = arith.constant 1.000000e+00 : f32
    %355 = vector.broadcast %cst_70 : f32 to vector<4x32xf32>
    %356 = arith.addf %355, %354 : vector<4x32xf32>
    %357 = arith.divf %355, %356 : vector<4x32xf32>
    %358 = vector.extract_strided_slice %346 {offsets = [0, 32], sizes = [4, 32], strides = [1, 1]} : vector<4x96xf32> to vector<4x32xf32>
    %359 = vector.extract_strided_slice %349 {offsets = [0, 32], sizes = [4, 32], strides = [1, 1]} : vector<4x96xf32> to vector<4x32xf32>
    %360 = arith.addf %358, %359 : vector<4x32xf32>
    %361 = arith.negf %360 : vector<4x32xf32>
    %362 = math.exp %361 : vector<4x32xf32>
    %cst_71 = arith.constant 1.000000e+00 : f32
    %363 = vector.broadcast %cst_71 : f32 to vector<4x32xf32>
    %364 = arith.addf %363, %362 : vector<4x32xf32>
    %365 = arith.divf %363, %364 : vector<4x32xf32>
    %366 = vector.extract_strided_slice %346 {offsets = [0, 64], sizes = [4, 32], strides = [1, 1]} : vector<4x96xf32> to vector<4x32xf32>
    %367 = vector.extract_strided_slice %349 {offsets = [0, 64], sizes = [4, 32], strides = [1, 1]} : vector<4x96xf32> to vector<4x32xf32>
    %368 = arith.mulf %357, %367 : vector<4x32xf32>
    %369 = arith.addf %366, %368 : vector<4x32xf32>
    %370 = math.tanh %369 : vector<4x32xf32>
    %cst_72 = arith.constant 1.000000e+00 : f32
    %371 = vector.broadcast %cst_72 : f32 to vector<4x32xf32>
    %372 = arith.subf %371, %365 : vector<4x32xf32>
    %373 = arith.mulf %372, %370 : vector<4x32xf32>
    %374 = arith.mulf %365, %305 : vector<4x32xf32>
    %375 = arith.addf %373, %374 : vector<4x32xf32>
    %376 = vector.broadcast %306 : i32 to vector<4x1xi32>
    %377 = arith.cmpi sgt, %0, %376 : vector<4x1xi32>
    %378 = vector.shape_cast %377 : vector<4x1xi1> to vector<4x1xi1>
    %379 = vector.broadcast %378 : vector<4x1xi1> to vector<4x32xi1>
    %380 = arith.select %379, %375, %305 : vector<4x32xi1>, vector<4x32xf32>
    %c5_i32 = arith.constant 5 : i32
    %c7_i32_73 = arith.constant 7 : i32
    %381 = arith.subi %c7_i32_73, %c5_i32 : i32
    %382 = arith.index_cast %c5_i32 : i32 to index
    %c0_74 = arith.constant 0 : index
    %c0_75 = arith.constant 0 : index
    %383 = vector.load %arg0[%382, %c0_74, %c0_75] : memref<8x4x96xf32, #tpu.memory_space<vmem>>, vector<1x4x96xf32>
    %384 = vector.shape_cast %383 : vector<1x4x96xf32> to vector<4x96xf32>
    %cst_76 = arith.constant dense<0.000000e+00> : vector<4x96xf32>
    %385 = tpu.matmul %343, %1, %cst_76 {dimension_numbers = #tpu.dot_dimension_numbers<[1], [0], [0], [1], [0, 0, 1, 1], [], []>} : vector<4x32xf32>, vector<32x96xf32>, vector<4x96xf32> -> vector<4x96xf32>
    %386 = vector.broadcast %2 : vector<1x96xf32> to vector<4x96xf32>
    %387 = arith.addf %385, %386 : vector<4x96xf32>
    %388 = vector.extract_strided_slice %384 {offsets = [0, 0], sizes = [4, 32], strides = [1, 1]} : vector<4x96xf32> to vector<4x32xf32>
    %389 = vector.extract_strided_slice %387 {offsets = [0, 0], sizes = [4, 32], strides = [1, 1]} : vector<4x96xf32> to vector<4x32xf32>
    %390 = arith.addf %388, %389 : vector<4x32xf32>
    %391 = arith.negf %390 : vector<4x32xf32>
    %392 = math.exp %391 : vector<4x32xf32>
    %cst_77 = arith.constant 1.000000e+00 : f32
    %393 = vector.broadcast %cst_77 : f32 to vector<4x32xf32>
    %394 = arith.addf %393, %392 : vector<4x32xf32>
    %395 = arith.divf %393, %394 : vector<4x32xf32>
    %396 = vector.extract_strided_slice %384 {offsets = [0, 32], sizes = [4, 32], strides = [1, 1]} : vector<4x96xf32> to vector<4x32xf32>
    %397 = vector.extract_strided_slice %387 {offsets = [0, 32], sizes = [4, 32], strides = [1, 1]} : vector<4x96xf32> to vector<4x32xf32>
    %398 = arith.addf %396, %397 : vector<4x32xf32>
    %399 = arith.negf %398 : vector<4x32xf32>
    %400 = math.exp %399 : vector<4x32xf32>
    %cst_78 = arith.constant 1.000000e+00 : f32
    %401 = vector.broadcast %cst_78 : f32 to vector<4x32xf32>
    %402 = arith.addf %401, %400 : vector<4x32xf32>
    %403 = arith.divf %401, %402 : vector<4x32xf32>
    %404 = vector.extract_strided_slice %384 {offsets = [0, 64], sizes = [4, 32], strides = [1, 1]} : vector<4x96xf32> to vector<4x32xf32>
    %405 = vector.extract_strided_slice %387 {offsets = [0, 64], sizes = [4, 32], strides = [1, 1]} : vector<4x96xf32> to vector<4x32xf32>
    %406 = arith.mulf %395, %405 : vector<4x32xf32>
    %407 = arith.addf %404, %406 : vector<4x32xf32>
    %408 = math.tanh %407 : vector<4x32xf32>
    %cst_79 = arith.constant 1.000000e+00 : f32
    %409 = vector.broadcast %cst_79 : f32 to vector<4x32xf32>
    %410 = arith.subf %409, %403 : vector<4x32xf32>
    %411 = arith.mulf %410, %408 : vector<4x32xf32>
    %412 = arith.mulf %403, %343 : vector<4x32xf32>
    %413 = arith.addf %411, %412 : vector<4x32xf32>
    %414 = vector.broadcast %c5_i32 : i32 to vector<4x1xi32>
    %415 = arith.cmpi sgt, %0, %414 : vector<4x1xi32>
    %416 = vector.shape_cast %415 : vector<4x1xi1> to vector<4x1xi1>
    %417 = vector.broadcast %416 : vector<4x1xi1> to vector<4x32xi1>
    %418 = arith.select %417, %413, %343 : vector<4x32xi1>, vector<4x32xf32>
    %419 = arith.index_cast %381 : i32 to index
    %c0_80 = arith.constant 0 : index
    %c0_81 = arith.constant 0 : index
    %420 = vector.load %arg1[%419, %c0_80, %c0_81] : memref<8x4x96xf32, #tpu.memory_space<vmem>>, vector<1x4x96xf32>
    %421 = vector.shape_cast %420 : vector<1x4x96xf32> to vector<4x96xf32>
    %cst_82 = arith.constant dense<0.000000e+00> : vector<4x96xf32>
    %422 = tpu.matmul %380, %3, %cst_82 {dimension_numbers = #tpu.dot_dimension_numbers<[1], [0], [0], [1], [0, 0, 1, 1], [], []>} : vector<4x32xf32>, vector<32x96xf32>, vector<4x96xf32> -> vector<4x96xf32>
    %423 = vector.broadcast %4 : vector<1x96xf32> to vector<4x96xf32>
    %424 = arith.addf %422, %423 : vector<4x96xf32>
    %425 = vector.extract_strided_slice %421 {offsets = [0, 0], sizes = [4, 32], strides = [1, 1]} : vector<4x96xf32> to vector<4x32xf32>
    %426 = vector.extract_strided_slice %424 {offsets = [0, 0], sizes = [4, 32], strides = [1, 1]} : vector<4x96xf32> to vector<4x32xf32>
    %427 = arith.addf %425, %426 : vector<4x32xf32>
    %428 = arith.negf %427 : vector<4x32xf32>
    %429 = math.exp %428 : vector<4x32xf32>
    %cst_83 = arith.constant 1.000000e+00 : f32
    %430 = vector.broadcast %cst_83 : f32 to vector<4x32xf32>
    %431 = arith.addf %430, %429 : vector<4x32xf32>
    %432 = arith.divf %430, %431 : vector<4x32xf32>
    %433 = vector.extract_strided_slice %421 {offsets = [0, 32], sizes = [4, 32], strides = [1, 1]} : vector<4x96xf32> to vector<4x32xf32>
    %434 = vector.extract_strided_slice %424 {offsets = [0, 32], sizes = [4, 32], strides = [1, 1]} : vector<4x96xf32> to vector<4x32xf32>
    %435 = arith.addf %433, %434 : vector<4x32xf32>
    %436 = arith.negf %435 : vector<4x32xf32>
    %437 = math.exp %436 : vector<4x32xf32>
    %cst_84 = arith.constant 1.000000e+00 : f32
    %438 = vector.broadcast %cst_84 : f32 to vector<4x32xf32>
    %439 = arith.addf %438, %437 : vector<4x32xf32>
    %440 = arith.divf %438, %439 : vector<4x32xf32>
    %441 = vector.extract_strided_slice %421 {offsets = [0, 64], sizes = [4, 32], strides = [1, 1]} : vector<4x96xf32> to vector<4x32xf32>
    %442 = vector.extract_strided_slice %424 {offsets = [0, 64], sizes = [4, 32], strides = [1, 1]} : vector<4x96xf32> to vector<4x32xf32>
    %443 = arith.mulf %432, %442 : vector<4x32xf32>
    %444 = arith.addf %441, %443 : vector<4x32xf32>
    %445 = math.tanh %444 : vector<4x32xf32>
    %cst_85 = arith.constant 1.000000e+00 : f32
    %446 = vector.broadcast %cst_85 : f32 to vector<4x32xf32>
    %447 = arith.subf %446, %440 : vector<4x32xf32>
    %448 = arith.mulf %447, %445 : vector<4x32xf32>
    %449 = arith.mulf %440, %380 : vector<4x32xf32>
    %450 = arith.addf %448, %449 : vector<4x32xf32>
    %451 = vector.broadcast %381 : i32 to vector<4x1xi32>
    %452 = arith.cmpi sgt, %0, %451 : vector<4x1xi32>
    %453 = vector.shape_cast %452 : vector<4x1xi1> to vector<4x1xi1>
    %454 = vector.broadcast %453 : vector<4x1xi1> to vector<4x32xi1>
    %455 = arith.select %454, %450, %380 : vector<4x32xi1>, vector<4x32xf32>
    %c6_i32 = arith.constant 6 : i32
    %c7_i32_86 = arith.constant 7 : i32
    %456 = arith.subi %c7_i32_86, %c6_i32 : i32
    %457 = arith.index_cast %c6_i32 : i32 to index
    %c0_87 = arith.constant 0 : index
    %c0_88 = arith.constant 0 : index
    %458 = vector.load %arg0[%457, %c0_87, %c0_88] : memref<8x4x96xf32, #tpu.memory_space<vmem>>, vector<1x4x96xf32>
    %459 = vector.shape_cast %458 : vector<1x4x96xf32> to vector<4x96xf32>
    %cst_89 = arith.constant dense<0.000000e+00> : vector<4x96xf32>
    %460 = tpu.matmul %418, %1, %cst_89 {dimension_numbers = #tpu.dot_dimension_numbers<[1], [0], [0], [1], [0, 0, 1, 1], [], []>} : vector<4x32xf32>, vector<32x96xf32>, vector<4x96xf32> -> vector<4x96xf32>
    %461 = vector.broadcast %2 : vector<1x96xf32> to vector<4x96xf32>
    %462 = arith.addf %460, %461 : vector<4x96xf32>
    %463 = vector.extract_strided_slice %459 {offsets = [0, 0], sizes = [4, 32], strides = [1, 1]} : vector<4x96xf32> to vector<4x32xf32>
    %464 = vector.extract_strided_slice %462 {offsets = [0, 0], sizes = [4, 32], strides = [1, 1]} : vector<4x96xf32> to vector<4x32xf32>
    %465 = arith.addf %463, %464 : vector<4x32xf32>
    %466 = arith.negf %465 : vector<4x32xf32>
    %467 = math.exp %466 : vector<4x32xf32>
    %cst_90 = arith.constant 1.000000e+00 : f32
    %468 = vector.broadcast %cst_90 : f32 to vector<4x32xf32>
    %469 = arith.addf %468, %467 : vector<4x32xf32>
    %470 = arith.divf %468, %469 : vector<4x32xf32>
    %471 = vector.extract_strided_slice %459 {offsets = [0, 32], sizes = [4, 32], strides = [1, 1]} : vector<4x96xf32> to vector<4x32xf32>
    %472 = vector.extract_strided_slice %462 {offsets = [0, 32], sizes = [4, 32], strides = [1, 1]} : vector<4x96xf32> to vector<4x32xf32>
    %473 = arith.addf %471, %472 : vector<4x32xf32>
    %474 = arith.negf %473 : vector<4x32xf32>
    %475 = math.exp %474 : vector<4x32xf32>
    %cst_91 = arith.constant 1.000000e+00 : f32
    %476 = vector.broadcast %cst_91 : f32 to vector<4x32xf32>
    %477 = arith.addf %476, %475 : vector<4x32xf32>
    %478 = arith.divf %476, %477 : vector<4x32xf32>
    %479 = vector.extract_strided_slice %459 {offsets = [0, 64], sizes = [4, 32], strides = [1, 1]} : vector<4x96xf32> to vector<4x32xf32>
    %480 = vector.extract_strided_slice %462 {offsets = [0, 64], sizes = [4, 32], strides = [1, 1]} : vector<4x96xf32> to vector<4x32xf32>
    %481 = arith.mulf %470, %480 : vector<4x32xf32>
    %482 = arith.addf %479, %481 : vector<4x32xf32>
    %483 = math.tanh %482 : vector<4x32xf32>
    %cst_92 = arith.constant 1.000000e+00 : f32
    %484 = vector.broadcast %cst_92 : f32 to vector<4x32xf32>
    %485 = arith.subf %484, %478 : vector<4x32xf32>
    %486 = arith.mulf %485, %483 : vector<4x32xf32>
    %487 = arith.mulf %478, %418 : vector<4x32xf32>
    %488 = arith.addf %486, %487 : vector<4x32xf32>
    %489 = vector.broadcast %c6_i32 : i32 to vector<4x1xi32>
    %490 = arith.cmpi sgt, %0, %489 : vector<4x1xi32>
    %491 = vector.shape_cast %490 : vector<4x1xi1> to vector<4x1xi1>
    %492 = vector.broadcast %491 : vector<4x1xi1> to vector<4x32xi1>
    %493 = arith.select %492, %488, %418 : vector<4x32xi1>, vector<4x32xf32>
    %494 = arith.index_cast %456 : i32 to index
    %c0_93 = arith.constant 0 : index
    %c0_94 = arith.constant 0 : index
    %495 = vector.load %arg1[%494, %c0_93, %c0_94] : memref<8x4x96xf32, #tpu.memory_space<vmem>>, vector<1x4x96xf32>
    %496 = vector.shape_cast %495 : vector<1x4x96xf32> to vector<4x96xf32>
    %cst_95 = arith.constant dense<0.000000e+00> : vector<4x96xf32>
    %497 = tpu.matmul %455, %3, %cst_95 {dimension_numbers = #tpu.dot_dimension_numbers<[1], [0], [0], [1], [0, 0, 1, 1], [], []>} : vector<4x32xf32>, vector<32x96xf32>, vector<4x96xf32> -> vector<4x96xf32>
    %498 = vector.broadcast %4 : vector<1x96xf32> to vector<4x96xf32>
    %499 = arith.addf %497, %498 : vector<4x96xf32>
    %500 = vector.extract_strided_slice %496 {offsets = [0, 0], sizes = [4, 32], strides = [1, 1]} : vector<4x96xf32> to vector<4x32xf32>
    %501 = vector.extract_strided_slice %499 {offsets = [0, 0], sizes = [4, 32], strides = [1, 1]} : vector<4x96xf32> to vector<4x32xf32>
    %502 = arith.addf %500, %501 : vector<4x32xf32>
    %503 = arith.negf %502 : vector<4x32xf32>
    %504 = math.exp %503 : vector<4x32xf32>
    %cst_96 = arith.constant 1.000000e+00 : f32
    %505 = vector.broadcast %cst_96 : f32 to vector<4x32xf32>
    %506 = arith.addf %505, %504 : vector<4x32xf32>
    %507 = arith.divf %505, %506 : vector<4x32xf32>
    %508 = vector.extract_strided_slice %496 {offsets = [0, 32], sizes = [4, 32], strides = [1, 1]} : vector<4x96xf32> to vector<4x32xf32>
    %509 = vector.extract_strided_slice %499 {offsets = [0, 32], sizes = [4, 32], strides = [1, 1]} : vector<4x96xf32> to vector<4x32xf32>
    %510 = arith.addf %508, %509 : vector<4x32xf32>
    %511 = arith.negf %510 : vector<4x32xf32>
    %512 = math.exp %511 : vector<4x32xf32>
    %cst_97 = arith.constant 1.000000e+00 : f32
    %513 = vector.broadcast %cst_97 : f32 to vector<4x32xf32>
    %514 = arith.addf %513, %512 : vector<4x32xf32>
    %515 = arith.divf %513, %514 : vector<4x32xf32>
    %516 = vector.extract_strided_slice %496 {offsets = [0, 64], sizes = [4, 32], strides = [1, 1]} : vector<4x96xf32> to vector<4x32xf32>
    %517 = vector.extract_strided_slice %499 {offsets = [0, 64], sizes = [4, 32], strides = [1, 1]} : vector<4x96xf32> to vector<4x32xf32>
    %518 = arith.mulf %507, %517 : vector<4x32xf32>
    %519 = arith.addf %516, %518 : vector<4x32xf32>
    %520 = math.tanh %519 : vector<4x32xf32>
    %cst_98 = arith.constant 1.000000e+00 : f32
    %521 = vector.broadcast %cst_98 : f32 to vector<4x32xf32>
    %522 = arith.subf %521, %515 : vector<4x32xf32>
    %523 = arith.mulf %522, %520 : vector<4x32xf32>
    %524 = arith.mulf %515, %455 : vector<4x32xf32>
    %525 = arith.addf %523, %524 : vector<4x32xf32>
    %526 = vector.broadcast %456 : i32 to vector<4x1xi32>
    %527 = arith.cmpi sgt, %0, %526 : vector<4x1xi32>
    %528 = vector.shape_cast %527 : vector<4x1xi1> to vector<4x1xi1>
    %529 = vector.broadcast %528 : vector<4x1xi1> to vector<4x32xi1>
    %530 = arith.select %529, %525, %455 : vector<4x32xi1>, vector<4x32xf32>
    %c7_i32_99 = arith.constant 7 : i32
    %c7_i32_100 = arith.constant 7 : i32
    %531 = arith.subi %c7_i32_100, %c7_i32_99 : i32
    %532 = arith.index_cast %c7_i32_99 : i32 to index
    %c0_101 = arith.constant 0 : index
    %c0_102 = arith.constant 0 : index
    %533 = vector.load %arg0[%532, %c0_101, %c0_102] : memref<8x4x96xf32, #tpu.memory_space<vmem>>, vector<1x4x96xf32>
    %534 = vector.shape_cast %533 : vector<1x4x96xf32> to vector<4x96xf32>
    %cst_103 = arith.constant dense<0.000000e+00> : vector<4x96xf32>
    %535 = tpu.matmul %493, %1, %cst_103 {dimension_numbers = #tpu.dot_dimension_numbers<[1], [0], [0], [1], [0, 0, 1, 1], [], []>} : vector<4x32xf32>, vector<32x96xf32>, vector<4x96xf32> -> vector<4x96xf32>
    %536 = vector.broadcast %2 : vector<1x96xf32> to vector<4x96xf32>
    %537 = arith.addf %535, %536 : vector<4x96xf32>
    %538 = vector.extract_strided_slice %534 {offsets = [0, 0], sizes = [4, 32], strides = [1, 1]} : vector<4x96xf32> to vector<4x32xf32>
    %539 = vector.extract_strided_slice %537 {offsets = [0, 0], sizes = [4, 32], strides = [1, 1]} : vector<4x96xf32> to vector<4x32xf32>
    %540 = arith.addf %538, %539 : vector<4x32xf32>
    %541 = arith.negf %540 : vector<4x32xf32>
    %542 = math.exp %541 : vector<4x32xf32>
    %cst_104 = arith.constant 1.000000e+00 : f32
    %543 = vector.broadcast %cst_104 : f32 to vector<4x32xf32>
    %544 = arith.addf %543, %542 : vector<4x32xf32>
    %545 = arith.divf %543, %544 : vector<4x32xf32>
    %546 = vector.extract_strided_slice %534 {offsets = [0, 32], sizes = [4, 32], strides = [1, 1]} : vector<4x96xf32> to vector<4x32xf32>
    %547 = vector.extract_strided_slice %537 {offsets = [0, 32], sizes = [4, 32], strides = [1, 1]} : vector<4x96xf32> to vector<4x32xf32>
    %548 = arith.addf %546, %547 : vector<4x32xf32>
    %549 = arith.negf %548 : vector<4x32xf32>
    %550 = math.exp %549 : vector<4x32xf32>
    %cst_105 = arith.constant 1.000000e+00 : f32
    %551 = vector.broadcast %cst_105 : f32 to vector<4x32xf32>
    %552 = arith.addf %551, %550 : vector<4x32xf32>
    %553 = arith.divf %551, %552 : vector<4x32xf32>
    %554 = vector.extract_strided_slice %534 {offsets = [0, 64], sizes = [4, 32], strides = [1, 1]} : vector<4x96xf32> to vector<4x32xf32>
    %555 = vector.extract_strided_slice %537 {offsets = [0, 64], sizes = [4, 32], strides = [1, 1]} : vector<4x96xf32> to vector<4x32xf32>
    %556 = arith.mulf %545, %555 : vector<4x32xf32>
    %557 = arith.addf %554, %556 : vector<4x32xf32>
    %558 = math.tanh %557 : vector<4x32xf32>
    %cst_106 = arith.constant 1.000000e+00 : f32
    %559 = vector.broadcast %cst_106 : f32 to vector<4x32xf32>
    %560 = arith.subf %559, %553 : vector<4x32xf32>
    %561 = arith.mulf %560, %558 : vector<4x32xf32>
    %562 = arith.mulf %553, %493 : vector<4x32xf32>
    %563 = arith.addf %561, %562 : vector<4x32xf32>
    %564 = vector.broadcast %c7_i32_99 : i32 to vector<4x1xi32>
    %565 = arith.cmpi sgt, %0, %564 : vector<4x1xi32>
    %566 = vector.shape_cast %565 : vector<4x1xi1> to vector<4x1xi1>
    %567 = vector.broadcast %566 : vector<4x1xi1> to vector<4x32xi1>
    %568 = arith.select %567, %563, %493 : vector<4x32xi1>, vector<4x32xf32>
    %569 = arith.index_cast %531 : i32 to index
    %c0_107 = arith.constant 0 : index
    %c0_108 = arith.constant 0 : index
    %570 = vector.load %arg1[%569, %c0_107, %c0_108] : memref<8x4x96xf32, #tpu.memory_space<vmem>>, vector<1x4x96xf32>
    %571 = vector.shape_cast %570 : vector<1x4x96xf32> to vector<4x96xf32>
    %cst_109 = arith.constant dense<0.000000e+00> : vector<4x96xf32>
    %572 = tpu.matmul %530, %3, %cst_109 {dimension_numbers = #tpu.dot_dimension_numbers<[1], [0], [0], [1], [0, 0, 1, 1], [], []>} : vector<4x32xf32>, vector<32x96xf32>, vector<4x96xf32> -> vector<4x96xf32>
    %573 = vector.broadcast %4 : vector<1x96xf32> to vector<4x96xf32>
    %574 = arith.addf %572, %573 : vector<4x96xf32>
    %575 = vector.extract_strided_slice %571 {offsets = [0, 0], sizes = [4, 32], strides = [1, 1]} : vector<4x96xf32> to vector<4x32xf32>
    %576 = vector.extract_strided_slice %574 {offsets = [0, 0], sizes = [4, 32], strides = [1, 1]} : vector<4x96xf32> to vector<4x32xf32>
    %577 = arith.addf %575, %576 : vector<4x32xf32>
    %578 = arith.negf %577 : vector<4x32xf32>
    %579 = math.exp %578 : vector<4x32xf32>
    %cst_110 = arith.constant 1.000000e+00 : f32
    %580 = vector.broadcast %cst_110 : f32 to vector<4x32xf32>
    %581 = arith.addf %580, %579 : vector<4x32xf32>
    %582 = arith.divf %580, %581 : vector<4x32xf32>
    %583 = vector.extract_strided_slice %571 {offsets = [0, 32], sizes = [4, 32], strides = [1, 1]} : vector<4x96xf32> to vector<4x32xf32>
    %584 = vector.extract_strided_slice %574 {offsets = [0, 32], sizes = [4, 32], strides = [1, 1]} : vector<4x96xf32> to vector<4x32xf32>
    %585 = arith.addf %583, %584 : vector<4x32xf32>
    %586 = arith.negf %585 : vector<4x32xf32>
    %587 = math.exp %586 : vector<4x32xf32>
    %cst_111 = arith.constant 1.000000e+00 : f32
    %588 = vector.broadcast %cst_111 : f32 to vector<4x32xf32>
    %589 = arith.addf %588, %587 : vector<4x32xf32>
    %590 = arith.divf %588, %589 : vector<4x32xf32>
    %591 = vector.extract_strided_slice %571 {offsets = [0, 64], sizes = [4, 32], strides = [1, 1]} : vector<4x96xf32> to vector<4x32xf32>
    %592 = vector.extract_strided_slice %574 {offsets = [0, 64], sizes = [4, 32], strides = [1, 1]} : vector<4x96xf32> to vector<4x32xf32>
    %593 = arith.mulf %582, %592 : vector<4x32xf32>
    %594 = arith.addf %591, %593 : vector<4x32xf32>
    %595 = math.tanh %594 : vector<4x32xf32>
    %cst_112 = arith.constant 1.000000e+00 : f32
    %596 = vector.broadcast %cst_112 : f32 to vector<4x32xf32>
    %597 = arith.subf %596, %590 : vector<4x32xf32>
    %598 = arith.mulf %597, %595 : vector<4x32xf32>
    %599 = arith.mulf %590, %530 : vector<4x32xf32>
    %600 = arith.addf %598, %599 : vector<4x32xf32>
    %601 = vector.broadcast %531 : i32 to vector<4x1xi32>
    %602 = arith.cmpi sgt, %0, %601 : vector<4x1xi32>
    %603 = vector.shape_cast %602 : vector<4x1xi1> to vector<4x1xi1>
    %604 = vector.broadcast %603 : vector<4x1xi1> to vector<4x32xi1>
    %605 = arith.select %604, %600, %530 : vector<4x32xi1>, vector<4x32xf32>
    %c8_i32 = arith.constant 8 : i32
    %606 = tpu.concatenate %605, %568 in 1 : vector<4x32xf32>, vector<4x32xf32> -> vector<4x64xf32>
    %c0_113 = arith.constant 0 : index
    %c0_114 = arith.constant 0 : index
    %607 = vector.load %arg7[%c0_113, %c0_114] : memref<64x4xf32, #tpu.memory_space<vmem>>, vector<64x4xf32>
    %cst_115 = arith.constant dense<0.000000e+00> : vector<4x4xf32>
    %608 = tpu.matmul %606, %607, %cst_115 {dimension_numbers = #tpu.dot_dimension_numbers<[1], [0], [0], [1], [0, 0, 1, 1], [], []>} : vector<4x64xf32>, vector<64x4xf32>, vector<4x4xf32> -> vector<4x4xf32>
    %c0_116 = arith.constant 0 : index
    %c0_117 = arith.constant 0 : index
    %609 = vector.load %arg8[%c0_116, %c0_117] : memref<1x4xf32, #tpu.memory_space<vmem>>, vector<1x4xf32>
    %610 = vector.broadcast %609 : vector<1x4xf32> to vector<4x4xf32>
    %611 = arith.addf %608, %610 : vector<4x4xf32>
    %c0_118 = arith.constant 0 : index
    %c0_119 = arith.constant 0 : index
    %612 = vector.load %arg9[%c0_118, %c0_119] : memref<4x4xf32, #tpu.memory_space<vmem>>, vector<4x4xf32>
    tpu.vector_store %arg9[%c0_118, %c0_119], %611 {strides = array<i32>} : memref<4x4xf32, #tpu.memory_space<vmem>>, vector<4x4xf32>,
    return
  }
}

</mosaic_0001>

<llo_original>
// kernel: tpu_custom_call.1
$region0: #{tpu_custom_call.1}
  #allocation0 [shape = 'u32[]', space=smem, size = 0x4, offset = 0x4, fixed_abs, tag = 'smem constant byte address 0x4 - core index']
  #allocation1 [shape = 'u32[144,128]{1,0:T(1,128)}', space=vmem, size = 0x12000, scoped, tag = 'internal scratch']
  %s0 = inlined_call_operand.vmem [shape: f32[8,4,96], index: 0, kind: input, shape index: {}]
  %s1 = inlined_call_operand.vmem [shape: f32[8,4,96], index: 1, kind: input, shape index: {}]
  %s2 = inlined_call_operand.vmem [shape: s32[4,1], index: 2, kind: input, shape index: {}]
  %s3 = inlined_call_operand.hbm [shape: f32[32,96], index: 3, kind: input, shape index: {}]
  %s4 = inlined_call_operand.vmem [shape: f32[1,96], index: 4, kind: input, shape index: {}]
  %s5 = inlined_call_operand.hbm [shape: f32[32,96], index: 5, kind: input, shape index: {}]
  %s6 = inlined_call_operand.vmem [shape: f32[1,96], index: 6, kind: input, shape index: {}]
  %s7 = inlined_call_operand.vmem [shape: f32[64,4], index: 7, kind: input, shape index: {}]
  %s8 = inlined_call_operand.vmem [shape: f32[1,4], index: 8, kind: input, shape index: {}]
  %s9 = inlined_call_operand.hbm [shape: f32[4,4], index: 9, kind: output, shape index: {}]
  %s10 = sld [smem:[#allocation0]]
  $region54: #{tpu_custom_call.1} parent=0
    _
  %s12 = ssub.s32 1, %s10
  %s13 = scalar_select 0, %s12, %s10
  $region1: #{tpu_custom_call.1} parent=0
    #allocation2 [shape = 'u8[16384]{0}', space=vmem, size = 0x4000, scoped, tag = 'input window, operand 3, single buffered']
    #allocation3 [shape = 's32[1]{0}', space=sflag, size = 0x4, scoped, tag = 'scoped memory for tpu_custom_call.1']
    #allocation4 [shape = 's32[1]{0}', space=sflag, size = 0x4, scoped, tag = 'scoped memory for tpu_custom_call.1']
    #allocation5 [shape = 'u8[16384]{0}', space=vmem, size = 0x4000, scoped, tag = 'input window, operand 5, single buffered']
    #allocation6 [shape = 's32[1]{0}', space=sflag, size = 0x4, scoped, tag = 'scoped memory for tpu_custom_call.1']
    #allocation7 [shape = 'u8[2048]{0}', space=vmem, size = 0x800, scoped, tag = 'output window, operand 0, single buffered']
    %14 = vsyncpa [#allocation3], 0
    %15 = vsyncpa [#allocation6], 0
    %16 = vsyncpa [#allocation4], 0
    // Predicated region
    $region2: #{tpu_custom_call.1} parent=1 // pred_check
      _
    $region3: #{tpu_custom_call.1} parent=1 // pred_check_branch
      %18 = sbr.rel (0) target = $region5
    $region4: #{tpu_custom_call.1} parent=1 // pred_region
      _
    $region5: #{tpu_custom_call.1} parent=1 // pred_fallthru
      _
    // Predicated region
    $region6: #{tpu_custom_call.1} parent=1 // pred_check
      _
    $region7: #{tpu_custom_call.1} parent=1 // pred_check_branch
      %20 = sbr.rel (0) target = $region9
    $region8: #{tpu_custom_call.1} parent=1 // pred_region
      _
    $region9: #{tpu_custom_call.1} parent=1 // pred_fallthru
      _
    // Predicated region
    $region10: #{tpu_custom_call.1} parent=1 // pred_check
      _
    $region11: #{tpu_custom_call.1} parent=1 // pred_check_branch
      %22 = sbr.rel (0) target = $region13
    $region12: #{tpu_custom_call.1} parent=1 // pred_region
      _
    $region13: #{tpu_custom_call.1} parent=1 // pred_fallthru
      _
    // Predicated region
    $region14: #{tpu_custom_call.1} parent=1 // pred_check
      _
    $region15: #{tpu_custom_call.1} parent=1 // pred_check_branch
      %24 = sbr.rel (0) target = $region17
    $region16: #{tpu_custom_call.1} parent=1 // pred_region
      %s26 = ssub.s32 512, 512
      %27 = vsyncadd [#allocation3], %s26
      %s28 = sshll.u32 [#allocation2], 4
      %s29 = int_to_ptr.vmem [resolvable:$true] %s28
      %34 = dma.hbm_to_vmem [thread:$0]  %s3, 512, %s29, [#allocation3], 128, 128, 8
    $region17: #{tpu_custom_call.1} parent=1 // pred_fallthru
      _
    // Predicated region
    $region18: #{tpu_custom_call.1} parent=1 // pred_check
      _
    $region19: #{tpu_custom_call.1} parent=1 // pred_check_branch
      %36 = sbr.rel (0) target = $region21
    $region20: #{tpu_custom_call.1} parent=1 // pred_region
      _
    $region21: #{tpu_custom_call.1} parent=1 // pred_fallthru
      _
    // Predicated region
    $region22: #{tpu_custom_call.1} parent=1 // pred_check
      _
    $region23: #{tpu_custom_call.1} parent=1 // pred_check_branch
      %38 = sbr.rel (0) target = $region25
    $region24: #{tpu_custom_call.1} parent=1 // pred_region
      %s40 = ssub.s32 512, 512
      %41 = vsyncadd [#allocation6], %s40
      %s42 = sshll.u32 [#allocation5], 4
      %s43 = int_to_ptr.vmem [resolvable:$true] %s42
      %48 = dma.hbm_to_vmem [thread:$0]  %s5, 512, %s43, [#allocation6], 128, 128, 8
    $region25: #{tpu_custom_call.1} parent=1 // pred_fallthru
      _
    // Predicated region
    $region26: #{tpu_custom_call.1} parent=1 // pred_check
      _
    $region27: #{tpu_custom_call.1} parent=1 // pred_check_branch
      %50 = sbr.rel (0) target = $region29
    $region28: #{tpu_custom_call.1} parent=1 // pred_region
      _
    $region29: #{tpu_custom_call.1} parent=1 // pred_fallthru
      _
    // Predicated region
    $region30: #{tpu_custom_call.1} parent=1 // pred_check
      _
    $region31: #{tpu_custom_call.1} parent=1 // pred_check_branch
      %52 = sbr.rel (0) target = $region33
    $region32: #{tpu_custom_call.1} parent=1 // pred_region
      _
    $region33: #{tpu_custom_call.1} parent=1 // pred_fallthru
      _
    // Predicated region
    $region34: #{tpu_custom_call.1} parent=1 // pred_check
      _
    $region35: #{tpu_custom_call.1} parent=1 // pred_check_branch
      %54 = sbr.rel (0) target = $region37
    $region36: #{tpu_custom_call.1} parent=1 // pred_region
      _
    $region37: #{tpu_custom_call.1} parent=1 // pred_fallthru
      _
    // Predicated region
    $region38: #{tpu_custom_call.1} parent=1 // pred_check
      _
    $region39: #{tpu_custom_call.1} parent=1 // pred_check_branch
      %56 = sbr.rel (0) target = $region41
    $region40: #{tpu_custom_call.1} parent=1 // pred_region
      %57 = dma.done [#allocation3], 512
    $region41: #{tpu_custom_call.1} parent=1 // pred_fallthru
      _
    // Predicated region
    $region42: #{tpu_custom_call.1} parent=1 // pred_check
      _
    $region43: #{tpu_custom_call.1} parent=1 // pred_check_branch
      %59 = sbr.rel (0) target = $region45
    $region44: #{tpu_custom_call.1} parent=1 // pred_region
      %60 = dma.done [#allocation6], 512
    $region45: #{tpu_custom_call.1} parent=1 // pred_fallthru
      _
    %v61 = vld [vmem:[%s2] sm:$0xf]
    %v62 = vld [vmem:[#allocation2] sm:$0xff]
    %v63 = vld [vmem:[#allocation2 + $0x8] sm:$0xff]
    %v64 = vld [vmem:[#allocation2 + $0x10] sm:$0xff]
    %v65 = vld [vmem:[#allocation2 + $0x18] sm:$0xff]
    %v66 = vld [vmem:[%s4] sm:$0x1]
    %v67 = vld [vmem:[#allocation5] sm:$0xff]
    %v68 = vld [vmem:[#allocation5 + $0x8] sm:$0xff]
    %v69 = vld [vmem:[#allocation5 + $0x10] sm:$0xff]
    %v70 = vld [vmem:[#allocation5 + $0x18] sm:$0xff]
    %v71 = vld [vmem:[%s6] sm:$0x1]
    %v72 = vld [vmem:[%s0] sm:$0xf]
    %v74 = vlaneseq
    %v75 = vshrl.u32 %v74, 7
    %v76 = vsub.s32 0, %v75
    %v77 = vrot.slane %v66, %v76
    %vm79 = vcmask 261120
    %v81 = vsel %vm79, 0.0, 0
    %83 = vmatprep.subr.mxu0 0.0
    %84 = vmatpush1.msra.mxu0 %v62
    %85 = vmatprep.subr.mxu0 0.0
    %86 = vmatpush1.msra.mxu0 %v63
    %87 = vmatprep.subr.mxu0 0.0
    %88 = vmatpush1.msra.mxu0 %v64
    %89 = vmatprep.subr.mxu0 0.0
    %90 = vmatpush1.msra.mxu0 %v65
    %91 = vmatprep.subr.mxu0 0.0
    %92 = vmatpush1.msra.mxu0 0.0
    %93 = vmatprep.subr.mxu0 0.0
    %94 = vmatpush1.msra.mxu0 0.0
    %95 = vmatprep.subr.mxu0 0.0
    %96 = vmatpush1.msra.mxu0 0.0
    %97 = vmatprep.subr.mxu0 0.0
    %98 = vmatpush1.msra.mxu0 0.0
    %99 = vmatprep.subr.mxu0 0.0
    %100 = vmatpush1.msra.mxu0 0.0
    %101 = vmatprep.subr.mxu0 0.0
    %102 = vmatpush1.msra.mxu0 0.0
    %103 = vmatprep.subr.mxu0 0.0
    %104 = vmatpush1.msra.mxu0 0.0
    %105 = vmatprep.subr.mxu0 0.0
    %106 = vmatpush1.msra.mxu0 0.0
    %107 = vmatprep.subr.mxu0 0.0
    %108 = vmatpush1.msra.mxu0 0.0
    %109 = vmatprep.subr.mxu0 0.0
    %110 = vmatpush1.msra.mxu0 0.0
    %111 = vmatprep.subr.mxu0 0.0
    %112 = vmatpush1.msra.mxu0 0.0
    %113 = vmatprep.subr.mxu0 0.0
    %114 = vmatpush1.msra.mxu0 0.0
    %115 = vmatprep.subr.mxu0 0.0
    %116 = vmatpush1.msra.mxu0 0.0
    %117 = vmatprep.subr.mxu0 0.0
    %118 = vmatpush1.msra.mxu0 0.0
    %119 = vmatprep.subr.mxu0 0.0
    %120 = vmatpush1.msra.mxu0 0.0
    %121 = vmatprep.subr.mxu0 0.0
    %122 = vmatpush1.msra.mxu0 0.0
    %123 = vmatprep.subr.mxu0 0.0
    %124 = vmatpush1.msra.mxu0 0.0
    %125 = vmatprep.subr.mxu0 0.0
    %126 = vmatpush1.msra.mxu0 0.0
    %127 = vmatprep.subr.mxu0 0.0
    %128 = vmatpush1.msra.mxu0 0.0
    %129 = vmatprep.subr.mxu0 0.0
    %130 = vmatpush1.msra.mxu0 0.0
    %131 = vmatprep.subr.mxu0 0.0
    %132 = vmatpush1.msra.mxu0 0.0
    %133 = vmatprep.subr.mxu0 0.0
    %134 = vmatpush1.msra.mxu0 0.0
    %135 = vmatprep.subr.mxu0 0.0
    %136 = vmatpush1.msra.mxu0 0.0
    %137 = vmatprep.subr.mxu0 0.0
    %138 = vmatpush1.msra.mxu0 0.0
    %139 = vmatprep.subr.mxu0 0.0
    %140 = vmatpush1.msra.mxu0 0.0
    %141 = vmatprep.subr.mxu0 0.0
    %142 = vmatpush1.msra.mxu0 0.0
    %143 = vmatprep.subr.mxu0 0.0
    %144 = vmatpush1.msra.mxu0 0.0
    %145 = vmatprep.subr.mxu0 0.0
    %146 = vmatpush1.msra.mxu0 0.0
    %147 = vmatprep.mubr.f32.mxu0 0.0
    %148 = vmatmul.mubr.f32.gmra.mrb[0].mxu0 %v81
    %v149 = vpop.f32.mrb[0].mxu0
    %v150 = vadd.f32 %v77, %v149
    %v151 = vpop.f32.mrb[0].mxu0
    %152 = vdwg.mxu0
    %v153 = vadd.f32 %v72, %v150
    %v154 = vxor.u32 %v153, 2147483648
    %v155 = vmul.f32 %v154, 1.442695
    %v156 = vpow.pop %v155
    %v157 = vadd.f32 %v156, 1.0
    %v158 = vrcp.pop %v157
    %v159 = vmul.f32 1.0, %v158
    %161 = vrot.lane.b32.xlu0 %v150, 64
    %v162 = vpop.permute.xlu0 %161
    %v164 = vmul.f32 %v159, %v162
    %166 = vrot.lane.b32.xlu0 %v164, 64
    %v167 = vpop.permute.xlu0 %166
    %v169 = vadd.f32 %v72, %v167
    %v170 = vtanh.pop %v169
    %v171 = vsub.f32 1.0, %v159
    %173 = vrot.lane.b32.xlu0 %v170, 96
    %v174 = vpop.permute.xlu0 %173
    %v176 = vmul.f32 %v171, %v174
    %v177 = vmul.f32 %v159, 0.0
    %v178 = vadd.f32 %v176, %v177
    %vm179 = vcmp.gt.s32.totalorder %v61, 0
    %v180 = vsel %vm179, 1, 0
    %181 = vset.pattern.permute.xlu0 0
    %182 = vperm.xlu0 %181, %v180
    %v183 = vpop.permute.xlu0 %182
    %vm184 = vcmp.eq.s32.totalorder %v183, 1
    %v185 = vsel %vm184, %v178, 0.0
    %s186 = scalar_lea.vmem %s1, 28
    %v187 = vld [vmem:[%s186] sm:$0xf]
    %v189 = vlaneseq
    %v190 = vshrl.u32 %v189, 7
    %v191 = vsub.s32 0, %v190
    %v192 = vrot.slane %v71, %v191
    %194 = vmatprep.subr.mxu0 0.0
    %195 = vmatpush1.msra.mxu0 %v67
    %196 = vmatprep.subr.mxu0 0.0
    %197 = vmatpush1.msra.mxu0 %v68
    %198 = vmatprep.subr.mxu0 0.0
    %199 = vmatpush1.msra.mxu0 %v69
    %200 = vmatprep.subr.mxu0 0.0
    %201 = vmatpush1.msra.mxu0 %v70
    %202 = vmatprep.subr.mxu0 0.0
    %203 = vmatpush1.msra.mxu0 0.0
    %204 = vmatprep.subr.mxu0 0.0
    %205 = vmatpush1.msra.mxu0 0.0
    %206 = vmatprep.subr.mxu0 0.0
    %207 = vmatpush1.msra.mxu0 0.0
    %208 = vmatprep.subr.mxu0 0.0
    %209 = vmatpush1.msra.mxu0 0.0
    %210 = vmatprep.subr.mxu0 0.0
    %211 = vmatpush1.msra.mxu0 0.0
    %212 = vmatprep.subr.mxu0 0.0
    %213 = vmatpush1.msra.mxu0 0.0
    %214 = vmatprep.subr.mxu0 0.0
    %215 = vmatpush1.msra.mxu0 0.0
    %216 = vmatprep.subr.mxu0 0.0
    %217 = vmatpush1.msra.mxu0 0.0
    %218 = vmatprep.subr.mxu0 0.0
    %219 = vmatpush1.msra.mxu0 0.0
    %220 = vmatprep.subr.mxu0 0.0
    %221 = vmatpush1.msra.mxu0 0.0
    %222 = vmatprep.subr.mxu0 0.0
    %223 = vmatpush1.msra.mxu0 0.0
    %224 = vmatprep.subr.mxu0 0.0
    %225 = vmatpush1.msra.mxu0 0.0
    %226 = vmatprep.subr.mxu0 0.0
    %227 = vmatpush1.msra.mxu0 0.0
    %228 = vmatprep.subr.mxu0 0.0
    %229 = vmatpush1.msra.mxu0 0.0
    %230 = vmatprep.subr.mxu0 0.0
    %231 = vmatpush1.msra.mxu0 0.0
    %232 = vmatprep.subr.mxu0 0.0
    %233 = vmatpush1.msra.mxu0 0.0
    %234 = vmatprep.subr.mxu0 0.0
    %235 = vmatpush1.msra.mxu0 0.0
    %236 = vmatprep.subr.mxu0 0.0
    %237 = vmatpush1.msra.mxu0 0.0
    %238 = vmatprep.subr.mxu0 0.0
    %239 = vmatpush1.msra.mxu0 0.0
    %240 = vmatprep.subr.mxu0 0.0
    %241 = vmatpush1.msra.mxu0 0.0
    %242 = vmatprep.subr.mxu0 0.0
    %243 = vmatpush1.msra.mxu0 0.0
    %244 = vmatprep.subr.mxu0 0.0
    %245 = vmatpush1.msra.mxu0 0.0
    %246 = vmatprep.subr.mxu0 0.0
    %247 = vmatpush1.msra.mxu0 0.0
    %248 = vmatprep.subr.mxu0 0.0
    %249 = vmatpush1.msra.mxu0 0.0
    %250 = vmatprep.subr.mxu0 0.0
    %251 = vmatpush1.msra.mxu0 0.0
    %252 = vmatprep.subr.mxu0 0.0
    %253 = vmatpush1.msra.mxu0 0.0
    %254 = vmatprep.subr.mxu0 0.0
    %255 = vmatpush1.msra.mxu0 0.0
    %256 = vmatprep.subr.mxu0 0.0
    %257 = vmatpush1.msra.mxu0 0.0
    %258 = vmatprep.mubr.f32.mxu0 0.0
    %259 = vmatmul.mubr.f32.gmra.mrb[0].mxu0 %v81
    %v260 = vpop.f32.mrb[0].mxu0
    %v261 = vadd.f32 %v192, %v260
    %v262 = vpop.f32.mrb[0].mxu0
    %263 = vdwg.mxu0
    %v264 = vadd.f32 %v187, %v261
    %v265 = vxor.u32 %v264, 2147483648
    %v266 = vmul.f32 %v265, 1.442695
    %v267 = vpow.pop %v266
    %v268 = vadd.f32 %v267, 1.0
    %v269 = vrcp.pop %v268
    %v270 = vmul.f32 1.0, %v269
    %272 = vrot.lane.b32.xlu0 %v261, 64
    %v273 = vpop.permute.xlu0 %272
    %v275 = vmul.f32 %v270, %v273
    %277 = vrot.lane.b32.xlu0 %v275, 64
    %v278 = vpop.permute.xlu0 %277
    %v280 = vadd.f32 %v187, %v278
    %v281 = vtanh.pop %v280
    %v282 = vsub.f32 1.0, %v270
    %284 = vrot.lane.b32.xlu0 %v281, 96
    %v285 = vpop.permute.xlu0 %284
    %v287 = vmul.f32 %v282, %v285
    %v288 = vmul.f32 %v270, 0.0
    %v289 = vadd.f32 %v287, %v288
    %vm290 = vcmp.gt.s32.totalorder %v61, 7
    %v291 = vsel %vm290, 1, 0
    %292 = vset.pattern.permute.xlu0 0
    %293 = vperm.xlu0 %292, %v291
    %v294 = vpop.permute.xlu0 %293
    %vm295 = vcmp.eq.s32.totalorder %v294, 1
    %v296 = vsel %vm295, %v289, 0.0
    %s297 = scalar_lea.vmem %s0, 4
    %v298 = vld [vmem:[%s297] sm:$0xf]
    %300 = vrot.lane.b32.xlu0 %v185, 96
    %v301 = vpop.permute.xlu0 %300
    %v302 = vsel %vm79, %v301, 0
    %304 = vmatprep.subr.mxu0 0.0
    %305 = vmatpush1.msra.mxu0 %v62
    %306 = vmatprep.subr.mxu0 0.0
    %307 = vmatpush1.msra.mxu0 %v63
    %308 = vmatprep.subr.mxu0 0.0
    %309 = vmatpush1.msra.mxu0 %v64
    %310 = vmatprep.subr.mxu0 0.0
    %311 = vmatpush1.msra.mxu0 %v65
    %312 = vmatprep.subr.mxu0 0.0
    %313 = vmatpush1.msra.mxu0 0.0
    %314 = vmatprep.subr.mxu0 0.0
    %315 = vmatpush1.msra.mxu0 0.0
    %316 = vmatprep.subr.mxu0 0.0
    %317 = vmatpush1.msra.mxu0 0.0
    %318 = vmatprep.subr.mxu0 0.0
    %319 = vmatpush1.msra.mxu0 0.0
    %320 = vmatprep.subr.mxu0 0.0
    %321 = vmatpush1.msra.mxu0 0.0
    %322 = vmatprep.subr.mxu0 0.0
    %323 = vmatpush1.msra.mxu0 0.0
    %324 = vmatprep.subr.mxu0 0.0
    %325 = vmatpush1.msra.mxu0 0.0
    %326 = vmatprep.subr.mxu0 0.0
    %327 = vmatpush1.msra.mxu0 0.0
    %328 = vmatprep.subr.mxu0 0.0
    %329 = vmatpush1.msra.mxu0 0.0
    %330 = vmatprep.subr.mxu0 0.0
    %331 = vmatpush1.msra.mxu0 0.0
    %332 = vmatprep.subr.mxu0 0.0
    %333 = vmatpush1.msra.mxu0 0.0
    %334 = vmatprep.subr.mxu0 0.0
    %335 = vmatpush1.msra.mxu0 0.0
    %336 = vmatprep.subr.mxu0 0.0
    %337 = vmatpush1.msra.mxu0 0.0
    %338 = vmatprep.subr.mxu0 0.0
    %339 = vmatpush1.msra.mxu0 0.0
    %340 = vmatprep.subr.mxu0 0.0
    %341 = vmatpush1.msra.mxu0 0.0
    %342 = vmatprep.subr.mxu0 0.0
    %343 = vmatpush1.msra.mxu0 0.0
    %344 = vmatprep.subr.mxu0 0.0
    %345 = vmatpush1.msra.mxu0 0.0
    %346 = vmatprep.subr.mxu0 0.0
    %347 = vmatpush1.msra.mxu0 0.0
    %348 = vmatprep.subr.mxu0 0.0
    %349 = vmatpush1.msra.mxu0 0.0
    %350 = vmatprep.subr.mxu0 0.0
    %351 = vmatpush1.msra.mxu0 0.0
    %352 = vmatprep.subr.mxu0 0.0
    %353 = vmatpush1.msra.mxu0 0.0
    %354 = vmatprep.subr.mxu0 0.0
    %355 = vmatpush1.msra.mxu0 0.0
    %356 = vmatprep.subr.mxu0 0.0
    %357 = vmatpush1.msra.mxu0 0.0
    %358 = vmatprep.subr.mxu0 0.0
    %359 = vmatpush1.msra.mxu0 0.0
    %360 = vmatprep.subr.mxu0 0.0
    %361 = vmatpush1.msra.mxu0 0.0
    %362 = vmatprep.subr.mxu0 0.0
    %363 = vmatpush1.msra.mxu0 0.0
    %364 = vmatprep.subr.mxu0 0.0
    %365 = vmatpush1.msra.mxu0 0.0
    %366 = vmatprep.subr.mxu0 0.0
    %367 = vmatpush1.msra.mxu0 0.0
    %368 = vmatprep.mubr.f32.mxu0 0.0
    %369 = vmatmul.mubr.f32.gmra.mrb[0].mxu0 %v302
    %v370 = vpop.f32.mrb[0].mxu0
    %v371 = vadd.f32 %v77, %v370
    %v372 = vpop.f32.mrb[0].mxu0
    %373 = vdwg.mxu0
    %v374 = vadd.f32 %v298, %v371
    %v375 = vxor.u32 %v374, 2147483648
    %v376 = vmul.f32 %v375, 1.442695
    %v377 = vpow.pop %v376
    %v378 = vadd.f32 %v377, 1.0
    %v379 = vrcp.pop %v378
    %v380 = vmul.f32 1.0, %v379
    %382 = vrot.lane.b32.xlu0 %v371, 64
    %v383 = vpop.permute.xlu0 %382
    %v385 = vmul.f32 %v380, %v383
    %387 = vrot.lane.b32.xlu0 %v385, 64
    %v388 = vpop.permute.xlu0 %387
    %v390 = vadd.f32 %v298, %v388
    %v391 = vtanh.pop %v390
    %v392 = vsub.f32 1.0, %v380
    %394 = vrot.lane.b32.xlu0 %v391, 96
    %v395 = vpop.permute.xlu0 %394
    %v397 = vmul.f32 %v392, %v395
    %v398 = vmul.f32 %v380, %v185
    %v399 = vadd.f32 %v397, %v398
    %vm400 = vcmp.gt.s32.totalorder %v61, 1
    %v401 = vsel %vm400, 1, 0
    %402 = vset.pattern.permute.xlu0 0
    %403 = vperm.xlu0 %402, %v401
    %v404 = vpop.permute.xlu0 %403
    %vm405 = vcmp.eq.s32.totalorder %v404, 1
    %v406 = vsel %vm405, %v399, %v185
    %s407 = scalar_lea.vmem %s1, 24
    %v408 = vld [vmem:[%s407] sm:$0xf]
    %410 = vrot.lane.b32.xlu0 %v296, 96
    %v411 = vpop.permute.xlu0 %410
    %v412 = vsel %vm79, %v411, 0
    %414 = vmatprep.subr.mxu0 0.0
    %415 = vmatpush1.msra.mxu0 %v67
    %416 = vmatprep.subr.mxu0 0.0
    %417 = vmatpush1.msra.mxu0 %v68
    %418 = vmatprep.subr.mxu0 0.0
    %419 = vmatpush1.msra.mxu0 %v69
    %420 = vmatprep.subr.mxu0 0.0
    %421 = vmatpush1.msra.mxu0 %v70
    %422 = vmatprep.subr.mxu0 0.0
    %423 = vmatpush1.msra.mxu0 0.0
    %424 = vmatprep.subr.mxu0 0.0
    %425 = vmatpush1.msra.mxu0 0.0
    %426 = vmatprep.subr.mxu0 0.0
    %427 = vmatpush1.msra.mxu0 0.0
    %428 = vmatprep.subr.mxu0 0.0
    %429 = vmatpush1.msra.mxu0 0.0
    %430 = vmatprep.subr.mxu0 0.0
    %431 = vmatpush1.msra.mxu0 0.0
    %432 = vmatprep.subr.mxu0 0.0
    %433 = vmatpush1.msra.mxu0 0.0
    %434 = vmatprep.subr.mxu0 0.0
    %435 = vmatpush1.msra.mxu0 0.0
    %436 = vmatprep.subr.mxu0 0.0
    %437 = vmatpush1.msra.mxu0 0.0
    %438 = vmatprep.subr.mxu0 0.0
    %439 = vmatpush1.msra.mxu0 0.0
    %440 = vmatprep.subr.mxu0 0.0
    %441 = vmatpush1.msra.mxu0 0.0
    %442 = vmatprep.subr.mxu0 0.0
    %443 = vmatpush1.msra.mxu0 0.0
    %444 = vmatprep.subr.mxu0 0.0
    %445 = vmatpush1.msra.mxu0 0.0
    %446 = vmatprep.subr.mxu0 0.0
    %447 = vmatpush1.msra.mxu0 0.0
    %448 = vmatprep.subr.mxu0 0.0
    %449 = vmatpush1.msra.mxu0 0.0
    %450 = vmatprep.subr.mxu0 0.0
    %451 = vmatpush1.msra.mxu0 0.0
    %452 = vmatprep.subr.mxu0 0.0
    %453 = vmatpush1.msra.mxu0 0.0
    %454 = vmatprep.subr.mxu0 0.0
    %455 = vmatpush1.msra.mxu0 0.0
    %456 = vmatprep.subr.mxu0 0.0
    %457 = vmatpush1.msra.mxu0 0.0
    %458 = vmatprep.subr.mxu0 0.0
    %459 = vmatpush1.msra.mxu0 0.0
    %460 = vmatprep.subr.mxu0 0.0
    %461 = vmatpush1.msra.mxu0 0.0
    %462 = vmatprep.subr.mxu0 0.0
    %463 = vmatpush1.msra.mxu0 0.0
    %464 = vmatprep.subr.mxu0 0.0
    %465 = vmatpush1.msra.mxu0 0.0
    %466 = vmatprep.subr.mxu0 0.0
    %467 = vmatpush1.msra.mxu0 0.0
    %468 = vmatprep.subr.mxu0 0.0
    %469 = vmatpush1.msra.mxu0 0.0
    %470 = vmatprep.subr.mxu0 0.0
    %471 = vmatpush1.msra.mxu0 0.0
    %472 = vmatprep.subr.mxu0 0.0
    %473 = vmatpush1.msra.mxu0 0.0
    %474 = vmatprep.subr.mxu0 0.0
    %475 = vmatpush1.msra.mxu0 0.0
    %476 = vmatprep.subr.mxu0 0.0
    %477 = vmatpush1.msra.mxu0 0.0
    %478 = vmatprep.mubr.f32.mxu0 0.0
    %479 = vmatmul.mubr.f32.gmra.mrb[0].mxu0 %v412
    %v480 = vpop.f32.mrb[0].mxu0
    %v481 = vadd.f32 %v192, %v480
    %v482 = vpop.f32.mrb[0].mxu0
    %483 = vdwg.mxu0
    %v484 = vadd.f32 %v408, %v481
    %v485 = vxor.u32 %v484, 2147483648
    %v486 = vmul.f32 %v485, 1.442695
    %v487 = vpow.pop %v486
    %v488 = vadd.f32 %v487, 1.0
    %v489 = vrcp.pop %v488
    %v490 = vmul.f32 1.0, %v489
    %492 = vrot.lane.b32.xlu0 %v481, 64
    %v493 = vpop.permute.xlu0 %492
    %v495 = vmul.f32 %v490, %v493
    %497 = vrot.lane.b32.xlu0 %v495, 64
    %v498 = vpop.permute.xlu0 %497
    %v500 = vadd.f32 %v408, %v498
    %v501 = vtanh.pop %v500
    %v502 = vsub.f32 1.0, %v490
    %504 = vrot.lane.b32.xlu0 %v501, 96
    %v505 = vpop.permute.xlu0 %504
    %v507 = vmul.f32 %v502, %v505
    %v508 = vmul.f32 %v490, %v296
    %v509 = vadd.f32 %v507, %v508
    %vm510 = vcmp.gt.s32.totalorder %v61, 6
    %v511 = vsel %vm510, 1, 0
    %512 = vset.pattern.permute.xlu0 0
    %513 = vperm.xlu0 %512, %v511
    %v514 = vpop.permute.xlu0 %513
    %vm515 = vcmp.eq.s32.totalorder %v514, 1
    %v516 = vsel %vm515, %v509, %v296
    %s517 = scalar_lea.vmem %s0, 8
    %v518 = vld [vmem:[%s517] sm:$0xf]
    %520 = vrot.lane.b32.xlu0 %v406, 96
    %v521 = vpop.permute.xlu0 %520
    %v522 = vsel %vm79, %v521, 0
    %524 = vmatprep.subr.mxu0 0.0
    %525 = vmatpush1.msra.mxu0 %v62
    %526 = vmatprep.subr.mxu0 0.0
    %527 = vmatpush1.msra.mxu0 %v63
    %528 = vmatprep.subr.mxu0 0.0
    %529 = vmatpush1.msra.mxu0 %v64
    %530 = vmatprep.subr.mxu0 0.0
    %531 = vmatpush1.msra.mxu0 %v65
    %532 = vmatprep.subr.mxu0 0.0
    %533 = vmatpush1.msra.mxu0 0.0
    %534 = vmatprep.subr.mxu0 0.0
    %535 = vmatpush1.msra.mxu0 0.0
    %536 = vmatprep.subr.mxu0 0.0
    %537 = vmatpush1.msra.mxu0 0.0
    %538 = vmatprep.subr.mxu0 0.0
    %539 = vmatpush1.msra.mxu0 0.0
    %540 = vmatprep.subr.mxu0 0.0
    %541 = vmatpush1.msra.mxu0 0.0
    %542 = vmatprep.subr.mxu0 0.0
    %543 = vmatpush1.msra.mxu0 0.0
    %544 = vmatprep.subr.mxu0 0.0
    %545 = vmatpush1.msra.mxu0 0.0
    %546 = vmatprep.subr.mxu0 0.0
    %547 = vmatpush1.msra.mxu0 0.0
    %548 = vmatprep.subr.mxu0 0.0
    %549 = vmatpush1.msra.mxu0 0.0
    %550 = vmatprep.subr.mxu0 0.0
    %551 = vmatpush1.msra.mxu0 0.0
    %552 = vmatprep.subr.mxu0 0.0
    %553 = vmatpush1.msra.mxu0 0.0
    %554 = vmatprep.subr.mxu0 0.0
    %555 = vmatpush1.msra.mxu0 0.0
    %556 = vmatprep.subr.mxu0 0.0
    %557 = vmatpush1.msra.mxu0 0.0
    %558 = vmatprep.subr.mxu0 0.0
    %559 = vmatpush1.msra.mxu0 0.0
    %560 = vmatprep.subr.mxu0 0.0
    %561 = vmatpush1.msra.mxu0 0.0
    %562 = vmatprep.subr.mxu0 0.0
    %563 = vmatpush1.msra.mxu0 0.0
    %564 = vmatprep.subr.mxu0 0.0
    %565 = vmatpush1.msra.mxu0 0.0
    %566 = vmatprep.subr.mxu0 0.0
    %567 = vmatpush1.msra.mxu0 0.0
    %568 = vmatprep.subr.mxu0 0.0
    %569 = vmatpush1.msra.mxu0 0.0
    %570 = vmatprep.subr.mxu0 0.0
    %571 = vmatpush1.msra.mxu0 0.0
    %572 = vmatprep.subr.mxu0 0.0
    %573 = vmatpush1.msra.mxu0 0.0
    %574 = vmatprep.subr.mxu0 0.0
    %575 = vmatpush1.msra.mxu0 0.0
    %576 = vmatprep.subr.mxu0 0.0
    %577 = vmatpush1.msra.mxu0 0.0
    %578 = vmatprep.subr.mxu0 0.0
    %579 = vmatpush1.msra.mxu0 0.0
    %580 = vmatprep.subr.mxu0 0.0
    %581 = vmatpush1.msra.mxu0 0.0
    %582 = vmatprep.subr.mxu0 0.0
    %583 = vmatpush1.msra.mxu0 0.0
    %584 = vmatprep.subr.mxu0 0.0
    %585 = vmatpush1.msra.mxu0 0.0
    %586 = vmatprep.subr.mxu0 0.0
    %587 = vmatpush1.msra.mxu0 0.0
    %588 = vmatprep.mubr.f32.mxu0 0.0
    %589 = vmatmul.mubr.f32.gmra.mrb[0].mxu0 %v522
    %v590 = vpop.f32.mrb[0].mxu0
    %v591 = vadd.f32 %v77, %v590
    %v592 = vpop.f32.mrb[0].mxu0
    %593 = vdwg.mxu0
    %v594 = vadd.f32 %v518, %v591
    %v595 = vxor.u32 %v594, 2147483648
    %v596 = vmul.f32 %v595, 1.442695
    %v597 = vpow.pop %v596
    %v598 = vadd.f32 %v597, 1.0
    %v599 = vrcp.pop %v598
    %v600 = vmul.f32 1.0, %v599
    %602 = vrot.lane.b32.xlu0 %v591, 64
    %v603 = vpop.permute.xlu0 %602
    %v605 = vmul.f32 %v600, %v603
    %607 = vrot.lane.b32.xlu0 %v605, 64
    %v608 = vpop.permute.xlu0 %607
    %v610 = vadd.f32 %v518, %v608
    %v611 = vtanh.pop %v610
    %v612 = vsub.f32 1.0, %v600
    %614 = vrot.lane.b32.xlu0 %v611, 96
    %v615 = vpop.permute.xlu0 %614
    %v617 = vmul.f32 %v612, %v615
    %v618 = vmul.f32 %v600, %v406
    %v619 = vadd.f32 %v617, %v618
    %vm620 = vcmp.gt.s32.totalorder %v61, 2
    %v621 = vsel %vm620, 1, 0
    %622 = vset.pattern.permute.xlu0 0
    %623 = vperm.xlu0 %622, %v621
    %v624 = vpop.permute.xlu0 %623
    %vm625 = vcmp.eq.s32.totalorder %v624, 1
    %v626 = vsel %vm625, %v619, %v406
    %s627 = scalar_lea.vmem %s1, 20
    %v628 = vld [vmem:[%s627] sm:$0xf]
    %630 = vrot.lane.b32.xlu0 %v516, 96
    %v631 = vpop.permute.xlu0 %630
    %v632 = vsel %vm79, %v631, 0
    %634 = vmatprep.subr.mxu0 0.0
    %635 = vmatpush1.msra.mxu0 %v67
    %636 = vmatprep.subr.mxu0 0.0
    %637 = vmatpush1.msra.mxu0 %v68
    %638 = vmatprep.subr.mxu0 0.0
    %639 = vmatpush1.msra.mxu0 %v69
    %640 = vmatprep.subr.mxu0 0.0
    %641 = vmatpush1.msra.mxu0 %v70
    %642 = vmatprep.subr.mxu0 0.0
    %643 = vmatpush1.msra.mxu0 0.0
    %644 = vmatprep.subr.mxu0 0.0
    %645 = vmatpush1.msra.mxu0 0.0
    %646 = vmatprep.subr.mxu0 0.0
    %647 = vmatpush1.msra.mxu0 0.0
    %648 = vmatprep.subr.mxu0 0.0
    %649 = vmatpush1.msra.mxu0 0.0
    %650 = vmatprep.subr.mxu0 0.0
    %651 = vmatpush1.msra.mxu0 0.0
    %652 = vmatprep.subr.mxu0 0.0
    %653 = vmatpush1.msra.mxu0 0.0
    %654 = vmatprep.subr.mxu0 0.0
    %655 = vmatpush1.msra.mxu0 0.0
    %656 = vmatprep.subr.mxu0 0.0
    %657 = vmatpush1.msra.mxu0 0.0
    %658 = vmatprep.subr.mxu0 0.0
    %659 = vmatpush1.msra.mxu0 0.0
    %660 = vmatprep.subr.mxu0 0.0
    %661 = vmatpush1.msra.mxu0 0.0
    %662 = vmatprep.subr.mxu0 0.0
    %663 = vmatpush1.msra.mxu0 0.0
    %664 = vmatprep.subr.mxu0 0.0
    %665 = vmatpush1.msra.mxu0 0.0
    %666 = vmatprep.subr.mxu0 0.0
    %667 = vmatpush1.msra.mxu0 0.0
    %668 = vmatprep.subr.mxu0 0.0
    %669 = vmatpush1.msra.mxu0 0.0
    %670 = vmatprep.subr.mxu0 0.0
    %671 = vmatpush1.msra.mxu0 0.0
    %672 = vmatprep.subr.mxu0 0.0
    %673 = vmatpush1.msra.mxu0 0.0
    %674 = vmatprep.subr.mxu0 0.0
    %675 = vmatpush1.msra.mxu0 0.0
    %676 = vmatprep.subr.mxu0 0.0
    %677 = vmatpush1.msra.mxu0 0.0
    %678 = vmatprep.subr.mxu0 0.0
    %679 = vmatpush1.msra.mxu0 0.0
    %680 = vmatprep.subr.mxu0 0.0
    %681 = vmatpush1.msra.mxu0 0.0
    %682 = vmatprep.subr.mxu0 0.0
    %683 = vmatpush1.msra.mxu0 0.0
    %684 = vmatprep.subr.mxu0 0.0
    %685 = vmatpush1.msra.mxu0 0.0
    %686 = vmatprep.subr.mxu0 0.0
    %687 = vmatpush1.msra.mxu0 0.0
    %688 = vmatprep.subr.mxu0 0.0
    %689 = vmatpush1.msra.mxu0 0.0
    %690 = vmatprep.subr.mxu0 0.0
    %691 = vmatpush1.msra.mxu0 0.0
    %692 = vmatprep.subr.mxu0 0.0
    %693 = vmatpush1.msra.mxu0 0.0
    %694 = vmatprep.subr.mxu0 0.0
    %695 = vmatpush1.msra.mxu0 0.0
    %696 = vmatprep.subr.mxu0 0.0
    %697 = vmatpush1.msra.mxu0 0.0
    %698 = vmatprep.mubr.f32.mxu0 0.0
    %699 = vmatmul.mubr.f32.gmra.mrb[0].mxu0 %v632
    %v700 = vpop.f32.mrb[0].mxu0
    %v701 = vadd.f32 %v192, %v700
    %v702 = vpop.f32.mrb[0].mxu0
    %703 = vdwg.mxu0
    %v704 = vadd.f32 %v628, %v701
    %v705 = vxor.u32 %v704, 2147483648
    %v706 = vmul.f32 %v705, 1.442695
    %v707 = vpow.pop %v706
    %v708 = vadd.f32 %v707, 1.0
    %v709 = vrcp.pop %v708
    %v710 = vmul.f32 1.0, %v709
    %712 = vrot.lane.b32.xlu0 %v701, 64
    %v713 = vpop.permute.xlu0 %712
    %v715 = vmul.f32 %v710, %v713
    %717 = vrot.lane.b32.xlu0 %v715, 64
    %v718 = vpop.permute.xlu0 %717
    %v720 = vadd.f32 %v628, %v718
    %v721 = vtanh.pop %v720
    %v722 = vsub.f32 1.0, %v710
    %724 = vrot.lane.b32.xlu0 %v721, 96
    %v725 = vpop.permute.xlu0 %724
    %v727 = vmul.f32 %v722, %v725
    %v728 = vmul.f32 %v710, %v516
    %v729 = vadd.f32 %v727, %v728
    %vm730 = vcmp.gt.s32.totalorder %v61, 5
    %v731 = vsel %vm730, 1, 0
    %732 = vset.pattern.permute.xlu0 0
    %733 = vperm.xlu0 %732, %v731
    %v734 = vpop.permute.xlu0 %733
    %vm735 = vcmp.eq.s32.totalorder %v734, 1
    %v736 = vsel %vm735, %v729, %v516
    %s737 = scalar_lea.vmem %s0, 12
    %v738 = vld [vmem:[%s737] sm:$0xf]
    %740 = vrot.lane.b32.xlu0 %v626, 96
    %v741 = vpop.permute.xlu0 %740
    %v742 = vsel %vm79, %v741, 0
    %744 = vmatprep.subr.mxu0 0.0
    %745 = vmatpush1.msra.mxu0 %v62
    %746 = vmatprep.subr.mxu0 0.0
    %747 = vmatpush1.msra.mxu0 %v63
    %748 = vmatprep.subr.mxu0 0.0
    %749 = vmatpush1.msra.mxu0 %v64
    %750 = vmatprep.subr.mxu0 0.0
    %751 = vmatpush1.msra.mxu0 %v65
    %752 = vmatprep.subr.mxu0 0.0
    %753 = vmatpush1.msra.mxu0 0.0
    %754 = vmatprep.subr.mxu0 0.0
    %755 = vmatpush1.msra.mxu0 0.0
    %756 = vmatprep.subr.mxu0 0.0
    %757 = vmatpush1.msra.mxu0 0.0
    %758 = vmatprep.subr.mxu0 0.0
    %759 = vmatpush1.msra.mxu0 0.0
    %760 = vmatprep.subr.mxu0 0.0
    %761 = vmatpush1.msra.mxu0 0.0
    %762 = vmatprep.subr.mxu0 0.0
    %763 = vmatpush1.msra.mxu0 0.0
    %764 = vmatprep.subr.mxu0 0.0
    %765 = vmatpush1.msra.mxu0 0.0
    %766 = vmatprep.subr.mxu0 0.0
    %767 = vmatpush1.msra.mxu0 0.0
    %768 = vmatprep.subr.mxu0 0.0
    %769 = vmatpush1.msra.mxu0 0.0
    %770 = vmatprep.subr.mxu0 0.0
    %771 = vmatpush1.msra.mxu0 0.0
    %772 = vmatprep.subr.mxu0 0.0
    %773 = vmatpush1.msra.mxu0 0.0
    %774 = vmatprep.subr.mxu0 0.0
    %775 = vmatpush1.msra.mxu0 0.0
    %776 = vmatprep.subr.mxu0 0.0
    %777 = vmatpush1.msra.mxu0 0.0
    %778 = vmatprep.subr.mxu0 0.0
    %779 = vmatpush1.msra.mxu0 0.0
    %780 = vmatprep.subr.mxu0 0.0
    %781 = vmatpush1.msra.mxu0 0.0
    %782 = vmatprep.subr.mxu0 0.0
    %783 = vmatpush1.msra.mxu0 0.0
    %784 = vmatprep.subr.mxu0 0.0
    %785 = vmatpush1.msra.mxu0 0.0
    %786 = vmatprep.subr.mxu0 0.0
    %787 = vmatpush1.msra.mxu0 0.0
    %788 = vmatprep.subr.mxu0 0.0
    %789 = vmatpush1.msra.mxu0 0.0
    %790 = vmatprep.subr.mxu0 0.0
    %791 = vmatpush1.msra.mxu0 0.0
    %792 = vmatprep.subr.mxu0 0.0
    %793 = vmatpush1.msra.mxu0 0.0
    %794 = vmatprep.subr.mxu0 0.0
    %795 = vmatpush1.msra.mxu0 0.0
    %796 = vmatprep.subr.mxu0 0.0
    %797 = vmatpush1.msra.mxu0 0.0
    %798 = vmatprep.subr.mxu0 0.0
    %799 = vmatpush1.msra.mxu0 0.0
    %800 = vmatprep.subr.mxu0 0.0
    %801 = vmatpush1.msra.mxu0 0.0
    %802 = vmatprep.subr.mxu0 0.0
    %803 = vmatpush1.msra.mxu0 0.0
    %804 = vmatprep.subr.mxu0 0.0
    %805 = vmatpush1.msra.mxu0 0.0
    %806 = vmatprep.subr.mxu0 0.0
    %807 = vmatpush1.msra.mxu0 0.0
    %808 = vmatprep.mubr.f32.mxu0 0.0
    %809 = vmatmul.mubr.f32.gmra.mrb[0].mxu0 %v742
    %v810 = vpop.f32.mrb[0].mxu0
    %v811 = vadd.f32 %v77, %v810
    %v812 = vpop.f32.mrb[0].mxu0
    %813 = vdwg.mxu0
    %v814 = vadd.f32 %v738, %v811
    %v815 = vxor.u32 %v814, 2147483648
    %v816 = vmul.f32 %v815, 1.442695
    %v817 = vpow.pop %v816
    %v818 = vadd.f32 %v817, 1.0
    %v819 = vrcp.pop %v818
    %v820 = vmul.f32 1.0, %v819
    %822 = vrot.lane.b32.xlu0 %v811, 64
    %v823 = vpop.permute.xlu0 %822
    %v825 = vmul.f32 %v820, %v823
    %827 = vrot.lane.b32.xlu0 %v825, 64
    %v828 = vpop.permute.xlu0 %827
    %v830 = vadd.f32 %v738, %v828
    %v831 = vtanh.pop %v830
    %v832 = vsub.f32 1.0, %v820
    %834 = vrot.lane.b32.xlu0 %v831, 96
    %v835 = vpop.permute.xlu0 %834
    %v837 = vmul.f32 %v832, %v835
    %v838 = vmul.f32 %v820, %v626
    %v839 = vadd.f32 %v837, %v838
    %vm840 = vcmp.gt.s32.totalorder %v61, 3
    %v841 = vsel %vm840, 1, 0
    %842 = vset.pattern.permute.xlu0 0
    %843 = vperm.xlu0 %842, %v841
    %v844 = vpop.permute.xlu0 %843
    %vm845 = vcmp.eq.s32.totalorder %v844, 1
    %v846 = vsel %vm845, %v839, %v626
    %s847 = scalar_lea.vmem %s1, 16
    %v848 = vld [vmem:[%s847] sm:$0xf]
    %850 = vrot.lane.b32.xlu0 %v736, 96
    %v851 = vpop.permute.xlu0 %850
    %v852 = vsel %vm79, %v851, 0
    %854 = vmatprep.subr.mxu0 0.0
    %855 = vmatpush1.msra.mxu0 %v67
    %856 = vmatprep.subr.mxu0 0.0
    %857 = vmatpush1.msra.mxu0 %v68
    %858 = vmatprep.subr.mxu0 0.0
    %859 = vmatpush1.msra.mxu0 %v69
    %860 = vmatprep.subr.mxu0 0.0
    %861 = vmatpush1.msra.mxu0 %v70
    %862 = vmatprep.subr.mxu0 0.0
    %863 = vmatpush1.msra.mxu0 0.0
    %864 = vmatprep.subr.mxu0 0.0
    %865 = vmatpush1.msra.mxu0 0.0
    %866 = vmatprep.subr.mxu0 0.0
    %867 = vmatpush1.msra.mxu0 0.0
    %868 = vmatprep.subr.mxu0 0.0
    %869 = vmatpush1.msra.mxu0 0.0
    %870 = vmatprep.subr.mxu0 0.0
    %871 = vmatpush1.msra.mxu0 0.0
    %872 = vmatprep.subr.mxu0 0.0
    %873 = vmatpush1.msra.mxu0 0.0
    %874 = vmatprep.subr.mxu0 0.0
    %875 = vmatpush1.msra.mxu0 0.0
    %876 = vmatprep.subr.mxu0 0.0
    %877 = vmatpush1.msra.mxu0 0.0
    %878 = vmatprep.subr.mxu0 0.0
    %879 = vmatpush1.msra.mxu0 0.0
    %880 = vmatprep.subr.mxu0 0.0
    %881 = vmatpush1.msra.mxu0 0.0
    %882 = vmatprep.subr.mxu0 0.0
    %883 = vmatpush1.msra.mxu0 0.0
    %884 = vmatprep.subr.mxu0 0.0
    %885 = vmatpush1.msra.mxu0 0.0
    %886 = vmatprep.subr.mxu0 0.0
    %887 = vmatpush1.msra.mxu0 0.0
    %888 = vmatprep.subr.mxu0 0.0
    %889 = vmatpush1.msra.mxu0 0.0
    %890 = vmatprep.subr.mxu0 0.0
    %891 = vmatpush1.msra.mxu0 0.0
    %892 = vmatprep.subr.mxu0 0.0
    %893 = vmatpush1.msra.mxu0 0.0
    %894 = vmatprep.subr.mxu0 0.0
    %895 = vmatpush1.msra.mxu0 0.0
    %896 = vmatprep.subr.mxu0 0.0
    %897 = vmatpush1.msra.mxu0 0.0
    %898 = vmatprep.subr.mxu0 0.0
    %899 = vmatpush1.msra.mxu0 0.0
    %900 = vmatprep.subr.mxu0 0.0
    %901 = vmatpush1.msra.mxu0 0.0
    %902 = vmatprep.subr.mxu0 0.0
    %903 = vmatpush1.msra.mxu0 0.0
    %904 = vmatprep.subr.mxu0 0.0
    %905 = vmatpush1.msra.mxu0 0.0
    %906 = vmatprep.subr.mxu0 0.0
    %907 = vmatpush1.msra.mxu0 0.0
    %908 = vmatprep.subr.mxu0 0.0
    %909 = vmatpush1.msra.mxu0 0.0
    %910 = vmatprep.subr.mxu0 0.0
    %911 = vmatpush1.msra.mxu0 0.0
    %912 = vmatprep.subr.mxu0 0.0
    %913 = vmatpush1.msra.mxu0 0.0
    %914 = vmatprep.subr.mxu0 0.0
    %915 = vmatpush1.msra.mxu0 0.0
    %916 = vmatprep.subr.mxu0 0.0
    %917 = vmatpush1.msra.mxu0 0.0
    %918 = vmatprep.mubr.f32.mxu0 0.0
    %919 = vmatmul.mubr.f32.gmra.mrb[0].mxu0 %v852
    %v920 = vpop.f32.mrb[0].mxu0
    %v921 = vadd.f32 %v192, %v920
    %v922 = vpop.f32.mrb[0].mxu0
    %923 = vdwg.mxu0
    %v924 = vadd.f32 %v848, %v921
    %v925 = vxor.u32 %v924, 2147483648
    %v926 = vmul.f32 %v925, 1.442695
    %v927 = vpow.pop %v926
    %v928 = vadd.f32 %v927, 1.0
    %v929 = vrcp.pop %v928
    %v930 = vmul.f32 1.0, %v929
    %932 = vrot.lane.b32.xlu0 %v921, 64
    %v933 = vpop.permute.xlu0 %932
    %v935 = vmul.f32 %v930, %v933
    %937 = vrot.lane.b32.xlu0 %v935, 64
    %v938 = vpop.permute.xlu0 %937
    %v940 = vadd.f32 %v848, %v938
    %v941 = vtanh.pop %v940
    %v942 = vsub.f32 1.0, %v930
    %944 = vrot.lane.b32.xlu0 %v941, 96
    %v945 = vpop.permute.xlu0 %944
    %v947 = vmul.f32 %v942, %v945
    %v948 = vmul.f32 %v930, %v736
    %v949 = vadd.f32 %v947, %v948
    %vm950 = vcmp.gt.s32.totalorder %v61, 4
    %v951 = vsel %vm950, 1, 0
    %952 = vset.pattern.permute.xlu0 0
    %953 = vperm.xlu0 %952, %v951
    %v954 = vpop.permute.xlu0 %953
    %vm955 = vcmp.eq.s32.totalorder %v954, 1
    %v956 = vsel %vm955, %v949, %v736
    %s957 = scalar_lea.vmem %s0, 16
    %v958 = vld [vmem:[%s957] sm:$0xf]
    %960 = vrot.lane.b32.xlu0 %v846, 96
    %v961 = vpop.permute.xlu0 %960
    %v962 = vsel %vm79, %v961, 0
    %964 = vmatprep.subr.mxu0 0.0
    %965 = vmatpush1.msra.mxu0 %v62
    %966 = vmatprep.subr.mxu0 0.0
    %967 = vmatpush1.msra.mxu0 %v63
    %968 = vmatprep.subr.mxu0 0.0
    %969 = vmatpush1.msra.mxu0 %v64
    %970 = vmatprep.subr.mxu0 0.0
    %971 = vmatpush1.msra.mxu0 %v65
    %972 = vmatprep.subr.mxu0 0.0
    %973 = vmatpush1.msra.mxu0 0.0
    %974 = vmatprep.subr.mxu0 0.0
    %975 = vmatpush1.msra.mxu0 0.0
    %976 = vmatprep.subr.mxu0 0.0
    %977 = vmatpush1.msra.mxu0 0.0
    %978 = vmatprep.subr.mxu0 0.0
    %979 = vmatpush1.msra.mxu0 0.0
    %980 = vmatprep.subr.mxu0 0.0
    %981 = vmatpush1.msra.mxu0 0.0
    %982 = vmatprep.subr.mxu0 0.0
    %983 = vmatpush1.msra.mxu0 0.0
    %984 = vmatprep.subr.mxu0 0.0
    %985 = vmatpush1.msra.mxu0 0.0
    %986 = vmatprep.subr.mxu0 0.0
    %987 = vmatpush1.msra.mxu0 0.0
    %988 = vmatprep.subr.mxu0 0.0
    %989 = vmatpush1.msra.mxu0 0.0
    %990 = vmatprep.subr.mxu0 0.0
    %991 = vmatpush1.msra.mxu0 0.0
    %992 = vmatprep.subr.mxu0 0.0
    %993 = vmatpush1.msra.mxu0 0.0
    %994 = vmatprep.subr.mxu0 0.0
    %995 = vmatpush1.msra.mxu0 0.0
    %996 = vmatprep.subr.mxu0 0.0
    %997 = vmatpush1.msra.mxu0 0.0
    %998 = vmatprep.subr.mxu0 0.0
    %999 = vmatpush1.msra.mxu0 0.0
    %1000 = vmatprep.subr.mxu0 0.0
    %1001 = vmatpush1.msra.mxu0 0.0
    %1002 = vmatprep.subr.mxu0 0.0
    %1003 = vmatpush1.msra.mxu0 0.0
    %1004 = vmatprep.subr.mxu0 0.0
    %1005 = vmatpush1.msra.mxu0 0.0
    %1006 = vmatprep.subr.mxu0 0.0
    %1007 = vmatpush1.msra.mxu0 0.0
    %1008 = vmatprep.subr.mxu0 0.0
    %1009 = vmatpush1.msra.mxu0 0.0
    %1010 = vmatprep.subr.mxu0 0.0
    %1011 = vmatpush1.msra.mxu0 0.0
    %1012 = vmatprep.subr.mxu0 0.0
    %1013 = vmatpush1.msra.mxu0 0.0
    %1014 = vmatprep.subr.mxu0 0.0
    %1015 = vmatpush1.msra.mxu0 0.0
    %1016 = vmatprep.subr.mxu0 0.0
    %1017 = vmatpush1.msra.mxu0 0.0
    %1018 = vmatprep.subr.mxu0 0.0
    %1019 = vmatpush1.msra.mxu0 0.0
    %1020 = vmatprep.subr.mxu0 0.0
    %1021 = vmatpush1.msra.mxu0 0.0
    %1022 = vmatprep.subr.mxu0 0.0
    %1023 = vmatpush1.msra.mxu0 0.0
    %1024 = vmatprep.subr.mxu0 0.0
    %1025 = vmatpush1.msra.mxu0 0.0
    %1026 = vmatprep.subr.mxu0 0.0
    %1027 = vmatpush1.msra.mxu0 0.0
    %1028 = vmatprep.mubr.f32.mxu0 0.0
    %1029 = vmatmul.mubr.f32.gmra.mrb[0].mxu0 %v962
    %v1030 = vpop.f32.mrb[0].mxu0
    %v1031 = vadd.f32 %v77, %v1030
    %v1032 = vpop.f32.mrb[0].mxu0
    %1033 = vdwg.mxu0
    %v1034 = vadd.f32 %v958, %v1031
    %v1035 = vxor.u32 %v1034, 2147483648
    %v1036 = vmul.f32 %v1035, 1.442695
    %v1037 = vpow.pop %v1036
    %v1038 = vadd.f32 %v1037, 1.0
    %v1039 = vrcp.pop %v1038
    %v1040 = vmul.f32 1.0, %v1039
    %1042 = vrot.lane.b32.xlu0 %v1031, 64
    %v1043 = vpop.permute.xlu0 %1042
    %v1045 = vmul.f32 %v1040, %v1043
    %1047 = vrot.lane.b32.xlu0 %v1045, 64
    %v1048 = vpop.permute.xlu0 %1047
    %v1050 = vadd.f32 %v958, %v1048
    %v1051 = vtanh.pop %v1050
    %v1052 = vsub.f32 1.0, %v1040
    %1054 = vrot.lane.b32.xlu0 %v1051, 96
    %v1055 = vpop.permute.xlu0 %1054
    %v1057 = vmul.f32 %v1052, %v1055
    %v1058 = vmul.f32 %v1040, %v846
    %v1059 = vadd.f32 %v1057, %v1058
    %v1060 = vsel %vm955, %v1059, %v846
    %s1061 = scalar_lea.vmem %s1, 12
    %v1062 = vld [vmem:[%s1061] sm:$0xf]
    %1064 = vrot.lane.b32.xlu0 %v956, 96
    %v1065 = vpop.permute.xlu0 %1064
    %v1066 = vsel %vm79, %v1065, 0
    %1068 = vmatprep.subr.mxu0 0.0
    %1069 = vmatpush1.msra.mxu0 %v67
    %1070 = vmatprep.subr.mxu0 0.0
    %1071 = vmatpush1.msra.mxu0 %v68
    %1072 = vmatprep.subr.mxu0 0.0
    %1073 = vmatpush1.msra.mxu0 %v69
    %1074 = vmatprep.subr.mxu0 0.0
    %1075 = vmatpush1.msra.mxu0 %v70
    %1076 = vmatprep.subr.mxu0 0.0
    %1077 = vmatpush1.msra.mxu0 0.0
    %1078 = vmatprep.subr.mxu0 0.0
    %1079 = vmatpush1.msra.mxu0 0.0
    %1080 = vmatprep.subr.mxu0 0.0
    %1081 = vmatpush1.msra.mxu0 0.0
    %1082 = vmatprep.subr.mxu0 0.0
    %1083 = vmatpush1.msra.mxu0 0.0
    %1084 = vmatprep.subr.mxu0 0.0
    %1085 = vmatpush1.msra.mxu0 0.0
    %1086 = vmatprep.subr.mxu0 0.0
    %1087 = vmatpush1.msra.mxu0 0.0
    %1088 = vmatprep.subr.mxu0 0.0
    %1089 = vmatpush1.msra.mxu0 0.0
    %1090 = vmatprep.subr.mxu0 0.0
    %1091 = vmatpush1.msra.mxu0 0.0
    %1092 = vmatprep.subr.mxu0 0.0
    %1093 = vmatpush1.msra.mxu0 0.0
    %1094 = vmatprep.subr.mxu0 0.0
    %1095 = vmatpush1.msra.mxu0 0.0
    %1096 = vmatprep.subr.mxu0 0.0
    %1097 = vmatpush1.msra.mxu0 0.0
    %1098 = vmatprep.subr.mxu0 0.0
    %1099 = vmatpush1.msra.mxu0 0.0
    %1100 = vmatprep.subr.mxu0 0.0
    %1101 = vmatpush1.msra.mxu0 0.0
    %1102 = vmatprep.subr.mxu0 0.0
    %1103 = vmatpush1.msra.mxu0 0.0
    %1104 = vmatprep.subr.mxu0 0.0
    %1105 = vmatpush1.msra.mxu0 0.0
    %1106 = vmatprep.subr.mxu0 0.0
    %1107 = vmatpush1.msra.mxu0 0.0
    %1108 = vmatprep.subr.mxu0 0.0
    %1109 = vmatpush1.msra.mxu0 0.0
    %1110 = vmatprep.subr.mxu0 0.0
    %1111 = vmatpush1.msra.mxu0 0.0
    %1112 = vmatprep.subr.mxu0 0.0
    %1113 = vmatpush1.msra.mxu0 0.0
    %1114 = vmatprep.subr.mxu0 0.0
    %1115 = vmatpush1.msra.mxu0 0.0
    %1116 = vmatprep.subr.mxu0 0.0
    %1117 = vmatpush1.msra.mxu0 0.0
    %1118 = vmatprep.subr.mxu0 0.0
    %1119 = vmatpush1.msra.mxu0 0.0
    %1120 = vmatprep.subr.mxu0 0.0
    %1121 = vmatpush1.msra.mxu0 0.0
    %1122 = vmatprep.subr.mxu0 0.0
    %1123 = vmatpush1.msra.mxu0 0.0
    %1124 = vmatprep.subr.mxu0 0.0
    %1125 = vmatpush1.msra.mxu0 0.0
    %1126 = vmatprep.subr.mxu0 0.0
    %1127 = vmatpush1.msra.mxu0 0.0
    %1128 = vmatprep.subr.mxu0 0.0
    %1129 = vmatpush1.msra.mxu0 0.0
    %1130 = vmatprep.subr.mxu0 0.0
    %1131 = vmatpush1.msra.mxu0 0.0
    %1132 = vmatprep.mubr.f32.mxu0 0.0
    %1133 = vmatmul.mubr.f32.gmra.mrb[0].mxu0 %v1066
    %v1134 = vpop.f32.mrb[0].mxu0
    %v1135 = vadd.f32 %v192, %v1134
    %v1136 = vpop.f32.mrb[0].mxu0
    %1137 = vdwg.mxu0
    %v1138 = vadd.f32 %v1062, %v1135
    %v1139 = vxor.u32 %v1138, 2147483648
    %v1140 = vmul.f32 %v1139, 1.442695
    %v1141 = vpow.pop %v1140
    %v1142 = vadd.f32 %v1141, 1.0
    %v1143 = vrcp.pop %v1142
    %v1144 = vmul.f32 1.0, %v1143
    %1146 = vrot.lane.b32.xlu0 %v1135, 64
    %v1147 = vpop.permute.xlu0 %1146
    %v1149 = vmul.f32 %v1144, %v1147
    %1151 = vrot.lane.b32.xlu0 %v1149, 64
    %v1152 = vpop.permute.xlu0 %1151
    %v1154 = vadd.f32 %v1062, %v1152
    %v1155 = vtanh.pop %v1154
    %v1156 = vsub.f32 1.0, %v1144
    %1158 = vrot.lane.b32.xlu0 %v1155, 96
    %v1159 = vpop.permute.xlu0 %1158
    %v1161 = vmul.f32 %v1156, %v1159
    %v1162 = vmul.f32 %v1144, %v956
    %v1163 = vadd.f32 %v1161, %v1162
    %v1164 = vsel %vm845, %v1163, %v956
    %s1165 = scalar_lea.vmem %s0, 20
    %v1166 = vld [vmem:[%s1165] sm:$0xf]
    %1168 = vrot.lane.b32.xlu0 %v1060, 96
    %v1169 = vpop.permute.xlu0 %1168
    %v1170 = vsel %vm79, %v1169, 0
    %1172 = vmatprep.subr.mxu0 0.0
    %1173 = vmatpush1.msra.mxu0 %v62
    %1174 = vmatprep.subr.mxu0 0.0
    %1175 = vmatpush1.msra.mxu0 %v63
    %1176 = vmatprep.subr.mxu0 0.0
    %1177 = vmatpush1.msra.mxu0 %v64
    %1178 = vmatprep.subr.mxu0 0.0
    %1179 = vmatpush1.msra.mxu0 %v65
    %1180 = vmatprep.subr.mxu0 0.0
    %1181 = vmatpush1.msra.mxu0 0.0
    %1182 = vmatprep.subr.mxu0 0.0
    %1183 = vmatpush1.msra.mxu0 0.0
    %1184 = vmatprep.subr.mxu0 0.0
    %1185 = vmatpush1.msra.mxu0 0.0
    %1186 = vmatprep.subr.mxu0 0.0
    %1187 = vmatpush1.msra.mxu0 0.0
    %1188 = vmatprep.subr.mxu0 0.0
    %1189 = vmatpush1.msra.mxu0 0.0
    %1190 = vmatprep.subr.mxu0 0.0
    %1191 = vmatpush1.msra.mxu0 0.0
    %1192 = vmatprep.subr.mxu0 0.0
    %1193 = vmatpush1.msra.mxu0 0.0
    %1194 = vmatprep.subr.mxu0 0.0
    %1195 = vmatpush1.msra.mxu0 0.0
    %1196 = vmatprep.subr.mxu0 0.0
    %1197 = vmatpush1.msra.mxu0 0.0
    %1198 = vmatprep.subr.mxu0 0.0
    %1199 = vmatpush1.msra.mxu0 0.0
    %1200 = vmatprep.subr.mxu0 0.0
    %1201 = vmatpush1.msra.mxu0 0.0
    %1202 = vmatprep.subr.mxu0 0.0
    %1203 = vmatpush1.msra.mxu0 0.0
    %1204 = vmatprep.subr.mxu0 0.0
    %1205 = vmatpush1.msra.mxu0 0.0
    %1206 = vmatprep.subr.mxu0 0.0
    %1207 = vmatpush1.msra.mxu0 0.0
    %1208 = vmatprep.subr.mxu0 0.0
    %1209 = vmatpush1.msra.mxu0 0.0
    %1210 = vmatprep.subr.mxu0 0.0
    %1211 = vmatpush1.msra.mxu0 0.0
    %1212 = vmatprep.subr.mxu0 0.0
    %1213 = vmatpush1.msra.mxu0 0.0
    %1214 = vmatprep.subr.mxu0 0.0
    %1215 = vmatpush1.msra.mxu0 0.0
    %1216 = vmatprep.subr.mxu0 0.0
    %1217 = vmatpush1.msra.mxu0 0.0
    %1218 = vmatprep.subr.mxu0 0.0
    %1219 = vmatpush1.msra.mxu0 0.0
    %1220 = vmatprep.subr.mxu0 0.0
    %1221 = vmatpush1.msra.mxu0 0.0
    %1222 = vmatprep.subr.mxu0 0.0
    %1223 = vmatpush1.msra.mxu0 0.0
    %1224 = vmatprep.subr.mxu0 0.0
    %1225 = vmatpush1.msra.mxu0 0.0
    %1226 = vmatprep.subr.mxu0 0.0
    %1227 = vmatpush1.msra.mxu0 0.0
    %1228 = vmatprep.subr.mxu0 0.0
    %1229 = vmatpush1.msra.mxu0 0.0
    %1230 = vmatprep.subr.mxu0 0.0
    %1231 = vmatpush1.msra.mxu0 0.0
    %1232 = vmatprep.subr.mxu0 0.0
    %1233 = vmatpush1.msra.mxu0 0.0
    %1234 = vmatprep.subr.mxu0 0.0
    %1235 = vmatpush1.msra.mxu0 0.0
    %1236 = vmatprep.mubr.f32.mxu0 0.0
    %1237 = vmatmul.mubr.f32.gmra.mrb[0].mxu0 %v1170
    %v1238 = vpop.f32.mrb[0].mxu0
    %v1239 = vadd.f32 %v77, %v1238
    %v1240 = vpop.f32.mrb[0].mxu0
    %1241 = vdwg.mxu0
    %v1242 = vadd.f32 %v1166, %v1239
    %v1243 = vxor.u32 %v1242, 2147483648
    %v1244 = vmul.f32 %v1243, 1.442695
    %v1245 = vpow.pop %v1244
    %v1246 = vadd.f32 %v1245, 1.0
    %v1247 = vrcp.pop %v1246
    %v1248 = vmul.f32 1.0, %v1247
    %1250 = vrot.lane.b32.xlu0 %v1239, 64
    %v1251 = vpop.permute.xlu0 %1250
    %v1253 = vmul.f32 %v1248, %v1251
    %1255 = vrot.lane.b32.xlu0 %v1253, 64
    %v1256 = vpop.permute.xlu0 %1255
    %v1258 = vadd.f32 %v1166, %v1256
    %v1259 = vtanh.pop %v1258
    %v1260 = vsub.f32 1.0, %v1248
    %1262 = vrot.lane.b32.xlu0 %v1259, 96
    %v1263 = vpop.permute.xlu0 %1262
    %v1265 = vmul.f32 %v1260, %v1263
    %v1266 = vmul.f32 %v1248, %v1060
    %v1267 = vadd.f32 %v1265, %v1266
    %v1268 = vsel %vm735, %v1267, %v1060
    %s1269 = scalar_lea.vmem %s1, 8
    %v1270 = vld [vmem:[%s1269] sm:$0xf]
    %1272 = vrot.lane.b32.xlu0 %v1164, 96
    %v1273 = vpop.permute.xlu0 %1272
    %v1274 = vsel %vm79, %v1273, 0
    %1276 = vmatprep.subr.mxu0 0.0
    %1277 = vmatpush1.msra.mxu0 %v67
    %1278 = vmatprep.subr.mxu0 0.0
    %1279 = vmatpush1.msra.mxu0 %v68
    %1280 = vmatprep.subr.mxu0 0.0
    %1281 = vmatpush1.msra.mxu0 %v69
    %1282 = vmatprep.subr.mxu0 0.0
    %1283 = vmatpush1.msra.mxu0 %v70
    %1284 = vmatprep.subr.mxu0 0.0
    %1285 = vmatpush1.msra.mxu0 0.0
    %1286 = vmatprep.subr.mxu0 0.0
    %1287 = vmatpush1.msra.mxu0 0.0
    %1288 = vmatprep.subr.mxu0 0.0
    %1289 = vmatpush1.msra.mxu0 0.0
    %1290 = vmatprep.subr.mxu0 0.0
    %1291 = vmatpush1.msra.mxu0 0.0
    %1292 = vmatprep.subr.mxu0 0.0
    %1293 = vmatpush1.msra.mxu0 0.0
    %1294 = vmatprep.subr.mxu0 0.0
    %1295 = vmatpush1.msra.mxu0 0.0
    %1296 = vmatprep.subr.mxu0 0.0
    %1297 = vmatpush1.msra.mxu0 0.0
    %1298 = vmatprep.subr.mxu0 0.0
    %1299 = vmatpush1.msra.mxu0 0.0
    %1300 = vmatprep.subr.mxu0 0.0
    %1301 = vmatpush1.msra.mxu0 0.0
    %1302 = vmatprep.subr.mxu0 0.0
    %1303 = vmatpush1.msra.mxu0 0.0
    %1304 = vmatprep.subr.mxu0 0.0
    %1305 = vmatpush1.msra.mxu0 0.0
    %1306 = vmatprep.subr.mxu0 0.0
    %1307 = vmatpush1.msra.mxu0 0.0
    %1308 = vmatprep.subr.mxu0 0.0
    %1309 = vmatpush1.msra.mxu0 0.0
    %1310 = vmatprep.subr.mxu0 0.0
    %1311 = vmatpush1.msra.mxu0 0.0
    %1312 = vmatprep.subr.mxu0 0.0
    %1313 = vmatpush1.msra.mxu0 0.0
    %1314 = vmatprep.subr.mxu0 0.0
    %1315 = vmatpush1.msra.mxu0 0.0
    %1316 = vmatprep.subr.mxu0 0.0
    %1317 = vmatpush1.msra.mxu0 0.0
    %1318 = vmatprep.subr.mxu0 0.0
    %1319 = vmatpush1.msra.mxu0 0.0
    %1320 = vmatprep.subr.mxu0 0.0
    %1321 = vmatpush1.msra.mxu0 0.0
    %1322 = vmatprep.subr.mxu0 0.0
    %1323 = vmatpush1.msra.mxu0 0.0
    %1324 = vmatprep.subr.mxu0 0.0
    %1325 = vmatpush1.msra.mxu0 0.0
    %1326 = vmatprep.subr.mxu0 0.0
    %1327 = vmatpush1.msra.mxu0 0.0
    %1328 = vmatprep.subr.mxu0 0.0
    %1329 = vmatpush1.msra.mxu0 0.0
    %1330 = vmatprep.subr.mxu0 0.0
    %1331 = vmatpush1.msra.mxu0 0.0
    %1332 = vmatprep.subr.mxu0 0.0
    %1333 = vmatpush1.msra.mxu0 0.0
    %1334 = vmatprep.subr.mxu0 0.0
    %1335 = vmatpush1.msra.mxu0 0.0
    %1336 = vmatprep.subr.mxu0 0.0
    %1337 = vmatpush1.msra.mxu0 0.0
    %1338 = vmatprep.subr.mxu0 0.0
    %1339 = vmatpush1.msra.mxu0 0.0
    %1340 = vmatprep.mubr.f32.mxu0 0.0
    %1341 = vmatmul.mubr.f32.gmra.mrb[0].mxu0 %v1274
    %v1342 = vpop.f32.mrb[0].mxu0
    %v1343 = vadd.f32 %v192, %v1342
    %v1344 = vpop.f32.mrb[0].mxu0
    %1345 = vdwg.mxu0
    %v1346 = vadd.f32 %v1270, %v1343
    %v1347 = vxor.u32 %v1346, 2147483648
    %v1348 = vmul.f32 %v1347, 1.442695
    %v1349 = vpow.pop %v1348
    %v1350 = vadd.f32 %v1349, 1.0
    %v1351 = vrcp.pop %v1350
    %v1352 = vmul.f32 1.0, %v1351
    %1354 = vrot.lane.b32.xlu0 %v1343, 64
    %v1355 = vpop.permute.xlu0 %1354
    %v1357 = vmul.f32 %v1352, %v1355
    %1359 = vrot.lane.b32.xlu0 %v1357, 64
    %v1360 = vpop.permute.xlu0 %1359
    %v1362 = vadd.f32 %v1270, %v1360
    %v1363 = vtanh.pop %v1362
    %v1364 = vsub.f32 1.0, %v1352
    %1366 = vrot.lane.b32.xlu0 %v1363, 96
    %v1367 = vpop.permute.xlu0 %1366
    %v1369 = vmul.f32 %v1364, %v1367
    %v1370 = vmul.f32 %v1352, %v1164
    %v1371 = vadd.f32 %v1369, %v1370
    %v1372 = vsel %vm625, %v1371, %v1164
    %s1373 = scalar_lea.vmem %s0, 24
    %v1374 = vld [vmem:[%s1373] sm:$0xf]
    %1376 = vrot.lane.b32.xlu0 %v1268, 96
    %v1377 = vpop.permute.xlu0 %1376
    %v1378 = vsel %vm79, %v1377, 0
    %1380 = vmatprep.subr.mxu0 0.0
    %1381 = vmatpush1.msra.mxu0 %v62
    %1382 = vmatprep.subr.mxu0 0.0
    %1383 = vmatpush1.msra.mxu0 %v63
    %1384 = vmatprep.subr.mxu0 0.0
    %1385 = vmatpush1.msra.mxu0 %v64
    %1386 = vmatprep.subr.mxu0 0.0
    %1387 = vmatpush1.msra.mxu0 %v65
    %1388 = vmatprep.subr.mxu0 0.0
    %1389 = vmatpush1.msra.mxu0 0.0
    %1390 = vmatprep.subr.mxu0 0.0
    %1391 = vmatpush1.msra.mxu0 0.0
    %1392 = vmatprep.subr.mxu0 0.0
    %1393 = vmatpush1.msra.mxu0 0.0
    %1394 = vmatprep.subr.mxu0 0.0
    %1395 = vmatpush1.msra.mxu0 0.0
    %1396 = vmatprep.subr.mxu0 0.0
    %1397 = vmatpush1.msra.mxu0 0.0
    %1398 = vmatprep.subr.mxu0 0.0
    %1399 = vmatpush1.msra.mxu0 0.0
    %1400 = vmatprep.subr.mxu0 0.0
    %1401 = vmatpush1.msra.mxu0 0.0
    %1402 = vmatprep.subr.mxu0 0.0
    %1403 = vmatpush1.msra.mxu0 0.0
    %1404 = vmatprep.subr.mxu0 0.0
    %1405 = vmatpush1.msra.mxu0 0.0
    %1406 = vmatprep.subr.mxu0 0.0
    %1407 = vmatpush1.msra.mxu0 0.0
    %1408 = vmatprep.subr.mxu0 0.0
    %1409 = vmatpush1.msra.mxu0 0.0
    %1410 = vmatprep.subr.mxu0 0.0
    %1411 = vmatpush1.msra.mxu0 0.0
    %1412 = vmatprep.subr.mxu0 0.0
    %1413 = vmatpush1.msra.mxu0 0.0
    %1414 = vmatprep.subr.mxu0 0.0
    %1415 = vmatpush1.msra.mxu0 0.0
    %1416 = vmatprep.subr.mxu0 0.0
    %1417 = vmatpush1.msra.mxu0 0.0
    %1418 = vmatprep.subr.mxu0 0.0
    %1419 = vmatpush1.msra.mxu0 0.0
    %1420 = vmatprep.subr.mxu0 0.0
    %1421 = vmatpush1.msra.mxu0 0.0
    %1422 = vmatprep.subr.mxu0 0.0
    %1423 = vmatpush1.msra.mxu0 0.0
    %1424 = vmatprep.subr.mxu0 0.0
    %1425 = vmatpush1.msra.mxu0 0.0
    %1426 = vmatprep.subr.mxu0 0.0
    %1427 = vmatpush1.msra.mxu0 0.0
    %1428 = vmatprep.subr.mxu0 0.0
    %1429 = vmatpush1.msra.mxu0 0.0
    %1430 = vmatprep.subr.mxu0 0.0
    %1431 = vmatpush1.msra.mxu0 0.0
    %1432 = vmatprep.subr.mxu0 0.0
    %1433 = vmatpush1.msra.mxu0 0.0
    %1434 = vmatprep.subr.mxu0 0.0
    %1435 = vmatpush1.msra.mxu0 0.0
    %1436 = vmatprep.subr.mxu0 0.0
    %1437 = vmatpush1.msra.mxu0 0.0
    %1438 = vmatprep.subr.mxu0 0.0
    %1439 = vmatpush1.msra.mxu0 0.0
    %1440 = vmatprep.subr.mxu0 0.0
    %1441 = vmatpush1.msra.mxu0 0.0
    %1442 = vmatprep.subr.mxu0 0.0
    %1443 = vmatpush1.msra.mxu0 0.0
    %1444 = vmatprep.mubr.f32.mxu0 0.0
    %1445 = vmatmul.mubr.f32.gmra.mrb[0].mxu0 %v1378
    %v1446 = vpop.f32.mrb[0].mxu0
    %v1447 = vadd.f32 %v77, %v1446
    %v1448 = vpop.f32.mrb[0].mxu0
    %1449 = vdwg.mxu0
    %v1450 = vadd.f32 %v1374, %v1447
    %v1451 = vxor.u32 %v1450, 2147483648
    %v1452 = vmul.f32 %v1451, 1.442695
    %v1453 = vpow.pop %v1452
    %v1454 = vadd.f32 %v1453, 1.0
    %v1455 = vrcp.pop %v1454
    %v1456 = vmul.f32 1.0, %v1455
    %1458 = vrot.lane.b32.xlu0 %v1447, 64
    %v1459 = vpop.permute.xlu0 %1458
    %v1461 = vmul.f32 %v1456, %v1459
    %1463 = vrot.lane.b32.xlu0 %v1461, 64
    %v1464 = vpop.permute.xlu0 %1463
    %v1466 = vadd.f32 %v1374, %v1464
    %v1467 = vtanh.pop %v1466
    %v1468 = vsub.f32 1.0, %v1456
    %1470 = vrot.lane.b32.xlu0 %v1467, 96
    %v1471 = vpop.permute.xlu0 %1470
    %v1473 = vmul.f32 %v1468, %v1471
    %v1474 = vmul.f32 %v1456, %v1268
    %v1475 = vadd.f32 %v1473, %v1474
    %v1476 = vsel %vm515, %v1475, %v1268
    %s1477 = scalar_lea.vmem %s1, 4
    %v1478 = vld [vmem:[%s1477] sm:$0xf]
    %1480 = vrot.lane.b32.xlu0 %v1372, 96
    %v1481 = vpop.permute.xlu0 %1480
    %v1482 = vsel %vm79, %v1481, 0
    %1484 = vmatprep.subr.mxu0 0.0
    %1485 = vmatpush1.msra.mxu0 %v67
    %1486 = vmatprep.subr.mxu0 0.0
    %1487 = vmatpush1.msra.mxu0 %v68
    %1488 = vmatprep.subr.mxu0 0.0
    %1489 = vmatpush1.msra.mxu0 %v69
    %1490 = vmatprep.subr.mxu0 0.0
    %1491 = vmatpush1.msra.mxu0 %v70
    %1492 = vmatprep.subr.mxu0 0.0
    %1493 = vmatpush1.msra.mxu0 0.0
    %1494 = vmatprep.subr.mxu0 0.0
    %1495 = vmatpush1.msra.mxu0 0.0
    %1496 = vmatprep.subr.mxu0 0.0
    %1497 = vmatpush1.msra.mxu0 0.0
    %1498 = vmatprep.subr.mxu0 0.0
    %1499 = vmatpush1.msra.mxu0 0.0
    %1500 = vmatprep.subr.mxu0 0.0
    %1501 = vmatpush1.msra.mxu0 0.0
    %1502 = vmatprep.subr.mxu0 0.0
    %1503 = vmatpush1.msra.mxu0 0.0
    %1504 = vmatprep.subr.mxu0 0.0
    %1505 = vmatpush1.msra.mxu0 0.0
    %1506 = vmatprep.subr.mxu0 0.0
    %1507 = vmatpush1.msra.mxu0 0.0
    %1508 = vmatprep.subr.mxu0 0.0
    %1509 = vmatpush1.msra.mxu0 0.0
    %1510 = vmatprep.subr.mxu0 0.0
    %1511 = vmatpush1.msra.mxu0 0.0
    %1512 = vmatprep.subr.mxu0 0.0
    %1513 = vmatpush1.msra.mxu0 0.0
    %1514 = vmatprep.subr.mxu0 0.0
    %1515 = vmatpush1.msra.mxu0 0.0
    %1516 = vmatprep.subr.mxu0 0.0
    %1517 = vmatpush1.msra.mxu0 0.0
    %1518 = vmatprep.subr.mxu0 0.0
    %1519 = vmatpush1.msra.mxu0 0.0
    %1520 = vmatprep.subr.mxu0 0.0
    %1521 = vmatpush1.msra.mxu0 0.0
    %1522 = vmatprep.subr.mxu0 0.0
    %1523 = vmatpush1.msra.mxu0 0.0
    %1524 = vmatprep.subr.mxu0 0.0
    %1525 = vmatpush1.msra.mxu0 0.0
    %1526 = vmatprep.subr.mxu0 0.0
    %1527 = vmatpush1.msra.mxu0 0.0
    %1528 = vmatprep.subr.mxu0 0.0
    %1529 = vmatpush1.msra.mxu0 0.0
    %1530 = vmatprep.subr.mxu0 0.0
    %1531 = vmatpush1.msra.mxu0 0.0
    %1532 = vmatprep.subr.mxu0 0.0
    %1533 = vmatpush1.msra.mxu0 0.0
    %1534 = vmatprep.subr.mxu0 0.0
    %1535 = vmatpush1.msra.mxu0 0.0
    %1536 = vmatprep.subr.mxu0 0.0
    %1537 = vmatpush1.msra.mxu0 0.0
    %1538 = vmatprep.subr.mxu0 0.0
    %1539 = vmatpush1.msra.mxu0 0.0
    %1540 = vmatprep.subr.mxu0 0.0
    %1541 = vmatpush1.msra.mxu0 0.0
    %1542 = vmatprep.subr.mxu0 0.0
    %1543 = vmatpush1.msra.mxu0 0.0
    %1544 = vmatprep.subr.mxu0 0.0
    %1545 = vmatpush1.msra.mxu0 0.0
    %1546 = vmatprep.subr.mxu0 0.0
    %1547 = vmatpush1.msra.mxu0 0.0
    %1548 = vmatprep.mubr.f32.mxu0 0.0
    %1549 = vmatmul.mubr.f32.gmra.mrb[0].mxu0 %v1482
    %v1550 = vpop.f32.mrb[0].mxu0
    %v1551 = vadd.f32 %v192, %v1550
    %v1552 = vpop.f32.mrb[0].mxu0
    %1553 = vdwg.mxu0
    %v1554 = vadd.f32 %v1478, %v1551
    %v1555 = vxor.u32 %v1554, 2147483648
    %v1556 = vmul.f32 %v1555, 1.442695
    %v1557 = vpow.pop %v1556
    %v1558 = vadd.f32 %v1557, 1.0
    %v1559 = vrcp.pop %v1558
    %v1560 = vmul.f32 1.0, %v1559
    %1562 = vrot.lane.b32.xlu0 %v1551, 64
    %v1563 = vpop.permute.xlu0 %1562
    %v1565 = vmul.f32 %v1560, %v1563
    %1567 = vrot.lane.b32.xlu0 %v1565, 64
    %v1568 = vpop.permute.xlu0 %1567
    %v1570 = vadd.f32 %v1478, %v1568
    %v1571 = vtanh.pop %v1570
    %v1572 = vsub.f32 1.0, %v1560
    %1574 = vrot.lane.b32.xlu0 %v1571, 96
    %v1575 = vpop.permute.xlu0 %1574
    %v1577 = vmul.f32 %v1572, %v1575
    %v1578 = vmul.f32 %v1560, %v1372
    %v1579 = vadd.f32 %v1577, %v1578
    %v1580 = vsel %vm405, %v1579, %v1372
    %s1581 = scalar_lea.vmem %s0, 28
    %v1582 = vld [vmem:[%s1581] sm:$0xf]
    %1584 = vrot.lane.b32.xlu0 %v1476, 96
    %v1585 = vpop.permute.xlu0 %1584
    %v1586 = vsel %vm79, %v1585, 0
    %1588 = vmatprep.subr.mxu0 0.0
    %1589 = vmatpush1.msra.mxu0 %v62
    %1590 = vmatprep.subr.mxu0 0.0
    %1591 = vmatpush1.msra.mxu0 %v63
    %1592 = vmatprep.subr.mxu0 0.0
    %1593 = vmatpush1.msra.mxu0 %v64
    %1594 = vmatprep.subr.mxu0 0.0
    %1595 = vmatpush1.msra.mxu0 %v65
    %1596 = vmatprep.subr.mxu0 0.0
    %1597 = vmatpush1.msra.mxu0 0.0
    %1598 = vmatprep.subr.mxu0 0.0
    %1599 = vmatpush1.msra.mxu0 0.0
    %1600 = vmatprep.subr.mxu0 0.0
    %1601 = vmatpush1.msra.mxu0 0.0
    %1602 = vmatprep.subr.mxu0 0.0
    %1603 = vmatpush1.msra.mxu0 0.0
    %1604 = vmatprep.subr.mxu0 0.0
    %1605 = vmatpush1.msra.mxu0 0.0
    %1606 = vmatprep.subr.mxu0 0.0
    %1607 = vmatpush1.msra.mxu0 0.0
    %1608 = vmatprep.subr.mxu0 0.0
    %1609 = vmatpush1.msra.mxu0 0.0
    %1610 = vmatprep.subr.mxu0 0.0
    %1611 = vmatpush1.msra.mxu0 0.0
    %1612 = vmatprep.subr.mxu0 0.0
    %1613 = vmatpush1.msra.mxu0 0.0
    %1614 = vmatprep.subr.mxu0 0.0
    %1615 = vmatpush1.msra.mxu0 0.0
    %1616 = vmatprep.subr.mxu0 0.0
    %1617 = vmatpush1.msra.mxu0 0.0
    %1618 = vmatprep.subr.mxu0 0.0
    %1619 = vmatpush1.msra.mxu0 0.0
    %1620 = vmatprep.subr.mxu0 0.0
    %1621 = vmatpush1.msra.mxu0 0.0
    %1622 = vmatprep.subr.mxu0 0.0
    %1623 = vmatpush1.msra.mxu0 0.0
    %1624 = vmatprep.subr.mxu0 0.0
    %1625 = vmatpush1.msra.mxu0 0.0
    %1626 = vmatprep.subr.mxu0 0.0
    %1627 = vmatpush1.msra.mxu0 0.0
    %1628 = vmatprep.subr.mxu0 0.0
    %1629 = vmatpush1.msra.mxu0 0.0
    %1630 = vmatprep.subr.mxu0 0.0
    %1631 = vmatpush1.msra.mxu0 0.0
    %1632 = vmatprep.subr.mxu0 0.0
    %1633 = vmatpush1.msra.mxu0 0.0
    %1634 = vmatprep.subr.mxu0 0.0
    %1635 = vmatpush1.msra.mxu0 0.0
    %1636 = vmatprep.subr.mxu0 0.0
    %1637 = vmatpush1.msra.mxu0 0.0
    %1638 = vmatprep.subr.mxu0 0.0
    %1639 = vmatpush1.msra.mxu0 0.0
    %1640 = vmatprep.subr.mxu0 0.0
    %1641 = vmatpush1.msra.mxu0 0.0
    %1642 = vmatprep.subr.mxu0 0.0
    %1643 = vmatpush1.msra.mxu0 0.0
    %1644 = vmatprep.subr.mxu0 0.0
    %1645 = vmatpush1.msra.mxu0 0.0
    %1646 = vmatprep.subr.mxu0 0.0
    %1647 = vmatpush1.msra.mxu0 0.0
    %1648 = vmatprep.subr.mxu0 0.0
    %1649 = vmatpush1.msra.mxu0 0.0
    %1650 = vmatprep.subr.mxu0 0.0
    %1651 = vmatpush1.msra.mxu0 0.0
    %1652 = vmatprep.mubr.f32.mxu0 0.0
    %1653 = vmatmul.mubr.f32.gmra.mrb[0].mxu0 %v1586
    %v1654 = vpop.f32.mrb[0].mxu0
    %v1655 = vadd.f32 %v77, %v1654
    %v1656 = vpop.f32.mrb[0].mxu0
    %1657 = vdwg.mxu0
    %v1658 = vadd.f32 %v1582, %v1655
    %v1659 = vxor.u32 %v1658, 2147483648
    %v1660 = vmul.f32 %v1659, 1.442695
    %v1661 = vpow.pop %v1660
    %v1662 = vadd.f32 %v1661, 1.0
    %v1663 = vrcp.pop %v1662
    %v1664 = vmul.f32 1.0, %v1663
    %1666 = vrot.lane.b32.xlu0 %v1655, 64
    %v1667 = vpop.permute.xlu0 %1666
    %v1669 = vmul.f32 %v1664, %v1667
    %1671 = vrot.lane.b32.xlu0 %v1669, 64
    %v1672 = vpop.permute.xlu0 %1671
    %v1674 = vadd.f32 %v1582, %v1672
    %v1675 = vtanh.pop %v1674
    %v1676 = vsub.f32 1.0, %v1664
    %1678 = vrot.lane.b32.xlu0 %v1675, 96
    %v1679 = vpop.permute.xlu0 %1678
    %v1681 = vmul.f32 %v1676, %v1679
    %v1682 = vmul.f32 %v1664, %v1476
    %v1683 = vadd.f32 %v1681, %v1682
    %v1684 = vsel %vm295, %v1683, %v1476
    %v1685 = vld [vmem:[%s1] sm:$0xf]
    %1687 = vrot.lane.b32.xlu0 %v1580, 96
    %v1688 = vpop.permute.xlu0 %1687
    %v1689 = vsel %vm79, %v1688, 0
    %1691 = vmatprep.subr.mxu0 0.0
    %1692 = vmatpush1.msra.mxu0 %v67
    %1693 = vmatprep.subr.mxu0 0.0
    %1694 = vmatpush1.msra.mxu0 %v68
    %1695 = vmatprep.subr.mxu0 0.0
    %1696 = vmatpush1.msra.mxu0 %v69
    %1697 = vmatprep.subr.mxu0 0.0
    %1698 = vmatpush1.msra.mxu0 %v70
    %1699 = vmatprep.subr.mxu0 0.0
    %1700 = vmatpush1.msra.mxu0 0.0
    %1701 = vmatprep.subr.mxu0 0.0
    %1702 = vmatpush1.msra.mxu0 0.0
    %1703 = vmatprep.subr.mxu0 0.0
    %1704 = vmatpush1.msra.mxu0 0.0
    %1705 = vmatprep.subr.mxu0 0.0
    %1706 = vmatpush1.msra.mxu0 0.0
    %1707 = vmatprep.subr.mxu0 0.0
    %1708 = vmatpush1.msra.mxu0 0.0
    %1709 = vmatprep.subr.mxu0 0.0
    %1710 = vmatpush1.msra.mxu0 0.0
    %1711 = vmatprep.subr.mxu0 0.0
    %1712 = vmatpush1.msra.mxu0 0.0
    %1713 = vmatprep.subr.mxu0 0.0
    %1714 = vmatpush1.msra.mxu0 0.0
    %1715 = vmatprep.subr.mxu0 0.0
    %1716 = vmatpush1.msra.mxu0 0.0
    %1717 = vmatprep.subr.mxu0 0.0
    %1718 = vmatpush1.msra.mxu0 0.0
    %1719 = vmatprep.subr.mxu0 0.0
    %1720 = vmatpush1.msra.mxu0 0.0
    %1721 = vmatprep.subr.mxu0 0.0
    %1722 = vmatpush1.msra.mxu0 0.0
    %1723 = vmatprep.subr.mxu0 0.0
    %1724 = vmatpush1.msra.mxu0 0.0
    %1725 = vmatprep.subr.mxu0 0.0
    %1726 = vmatpush1.msra.mxu0 0.0
    %1727 = vmatprep.subr.mxu0 0.0
    %1728 = vmatpush1.msra.mxu0 0.0
    %1729 = vmatprep.subr.mxu0 0.0
    %1730 = vmatpush1.msra.mxu0 0.0
    %1731 = vmatprep.subr.mxu0 0.0
    %1732 = vmatpush1.msra.mxu0 0.0
    %1733 = vmatprep.subr.mxu0 0.0
    %1734 = vmatpush1.msra.mxu0 0.0
    %1735 = vmatprep.subr.mxu0 0.0
    %1736 = vmatpush1.msra.mxu0 0.0
    %1737 = vmatprep.subr.mxu0 0.0
    %1738 = vmatpush1.msra.mxu0 0.0
    %1739 = vmatprep.subr.mxu0 0.0
    %1740 = vmatpush1.msra.mxu0 0.0
    %1741 = vmatprep.subr.mxu0 0.0
    %1742 = vmatpush1.msra.mxu0 0.0
    %1743 = vmatprep.subr.mxu0 0.0
    %1744 = vmatpush1.msra.mxu0 0.0
    %1745 = vmatprep.subr.mxu0 0.0
    %1746 = vmatpush1.msra.mxu0 0.0
    %1747 = vmatprep.subr.mxu0 0.0
    %1748 = vmatpush1.msra.mxu0 0.0
    %1749 = vmatprep.subr.mxu0 0.0
    %1750 = vmatpush1.msra.mxu0 0.0
    %1751 = vmatprep.subr.mxu0 0.0
    %1752 = vmatpush1.msra.mxu0 0.0
    %1753 = vmatprep.subr.mxu0 0.0
    %1754 = vmatpush1.msra.mxu0 0.0
    %1755 = vmatprep.mubr.f32.mxu0 0.0
    %1756 = vmatmul.mubr.f32.gmra.mrb[0].mxu0 %v1689
    %v1757 = vpop.f32.mrb[0].mxu0
    %v1758 = vadd.f32 %v192, %v1757
    %v1759 = vpop.f32.mrb[0].mxu0
    %1760 = vdwg.mxu0
    %v1761 = vadd.f32 %v1685, %v1758
    %v1762 = vxor.u32 %v1761, 2147483648
    %v1763 = vmul.f32 %v1762, 1.442695
    %v1764 = vpow.pop %v1763
    %v1765 = vadd.f32 %v1764, 1.0
    %v1766 = vrcp.pop %v1765
    %v1767 = vmul.f32 1.0, %v1766
    %1769 = vrot.lane.b32.xlu0 %v1758, 64
    %v1770 = vpop.permute.xlu0 %1769
    %v1772 = vmul.f32 %v1767, %v1770
    %1774 = vrot.lane.b32.xlu0 %v1772, 64
    %v1775 = vpop.permute.xlu0 %1774
    %v1777 = vadd.f32 %v1685, %v1775
    %v1778 = vtanh.pop %v1777
    %v1779 = vsub.f32 1.0, %v1767
    %1781 = vrot.lane.b32.xlu0 %v1778, 96
    %v1782 = vpop.permute.xlu0 %1781
    %v1784 = vmul.f32 %v1779, %v1782
    %v1785 = vmul.f32 %v1767, %v1580
    %v1786 = vadd.f32 %v1784, %v1785
    %v1787 = vsel %vm184, %v1786, %v1580
    %1789 = vrot.lane.b32.xlu0 %v1787, 96
    %v1790 = vpop.permute.xlu0 %1789
    %v1792 = vsel %vm79, %v1790, %v1684
    %v1793 = vld [vmem:[%s7] sm:$0xff]
    %v1794 = vld [vmem:[%s7 + $0x8] sm:$0xff]
    %v1795 = vld [vmem:[%s7 + $0x10] sm:$0xff]
    %v1796 = vld [vmem:[%s7 + $0x18] sm:$0xff]
    %v1797 = vld [vmem:[%s7 + $0x20] sm:$0xff]
    %v1798 = vld [vmem:[%s7 + $0x28] sm:$0xff]
    %v1799 = vld [vmem:[%s7 + $0x30] sm:$0xff]
    %v1800 = vld [vmem:[%s7 + $0x38] sm:$0xff]
    %v1801 = vld [vmem:[%s8] sm:$0x1]
    %v1803 = vlaneseq
    %v1804 = vshrl.u32 %v1803, 7
    %v1805 = vsub.s32 0, %v1804
    %v1806 = vrot.slane %v1801, %v1805
    %vm1808 = vcmask 523264
    %v1810 = vsel %vm1808, %v1792, 0
    %1812 = vmatprep.subr.mxu0 0.0
    %1813 = vmatpush1.msra.mxu0 %v1793
    %1814 = vmatprep.subr.mxu0 0.0
    %1815 = vmatpush1.msra.mxu0 %v1794
    %1816 = vmatprep.subr.mxu0 0.0
    %1817 = vmatpush1.msra.mxu0 %v1795
    %1818 = vmatprep.subr.mxu0 0.0
    %1819 = vmatpush1.msra.mxu0 %v1796
    %1820 = vmatprep.subr.mxu0 0.0
    %1821 = vmatpush1.msra.mxu0 %v1797
    %1822 = vmatprep.subr.mxu0 0.0
    %1823 = vmatpush1.msra.mxu0 %v1798
    %1824 = vmatprep.subr.mxu0 0.0
    %1825 = vmatpush1.msra.mxu0 %v1799
    %1826 = vmatprep.subr.mxu0 0.0
    %1827 = vmatpush1.msra.mxu0 %v1800
    %1828 = vmatprep.subr.mxu0 0.0
    %1829 = vmatpush1.msra.mxu0 0.0
    %1830 = vmatprep.subr.mxu0 0.0
    %1831 = vmatpush1.msra.mxu0 0.0
    %1832 = vmatprep.subr.mxu0 0.0
    %1833 = vmatpush1.msra.mxu0 0.0
    %1834 = vmatprep.subr.mxu0 0.0
    %1835 = vmatpush1.msra.mxu0 0.0
    %1836 = vmatprep.subr.mxu0 0.0
    %1837 = vmatpush1.msra.mxu0 0.0
    %1838 = vmatprep.subr.mxu0 0.0
    %1839 = vmatpush1.msra.mxu0 0.0
    %1840 = vmatprep.subr.mxu0 0.0
    %1841 = vmatpush1.msra.mxu0 0.0
    %1842 = vmatprep.subr.mxu0 0.0
    %1843 = vmatpush1.msra.mxu0 0.0
    %1844 = vmatprep.subr.mxu0 0.0
    %1845 = vmatpush1.msra.mxu0 0.0
    %1846 = vmatprep.subr.mxu0 0.0
    %1847 = vmatpush1.msra.mxu0 0.0
    %1848 = vmatprep.subr.mxu0 0.0
    %1849 = vmatpush1.msra.mxu0 0.0
    %1850 = vmatprep.subr.mxu0 0.0
    %1851 = vmatpush1.msra.mxu0 0.0
    %1852 = vmatprep.subr.mxu0 0.0
    %1853 = vmatpush1.msra.mxu0 0.0
    %1854 = vmatprep.subr.mxu0 0.0
    %1855 = vmatpush1.msra.mxu0 0.0
    %1856 = vmatprep.subr.mxu0 0.0
    %1857 = vmatpush1.msra.mxu0 0.0
    %1858 = vmatprep.subr.mxu0 0.0
    %1859 = vmatpush1.msra.mxu0 0.0
    %1860 = vmatprep.subr.mxu0 0.0
    %1861 = vmatpush1.msra.mxu0 0.0
    %1862 = vmatprep.subr.mxu0 0.0
    %1863 = vmatpush1.msra.mxu0 0.0
    %1864 = vmatprep.subr.mxu0 0.0
    %1865 = vmatpush1.msra.mxu0 0.0
    %1866 = vmatprep.subr.mxu0 0.0
    %1867 = vmatpush1.msra.mxu0 0.0
    %1868 = vmatprep.subr.mxu0 0.0
    %1869 = vmatpush1.msra.mxu0 0.0
    %1870 = vmatprep.subr.mxu0 0.0
    %1871 = vmatpush1.msra.mxu0 0.0
    %1872 = vmatprep.subr.mxu0 0.0
    %1873 = vmatpush1.msra.mxu0 0.0
    %1874 = vmatprep.subr.mxu0 0.0
    %1875 = vmatpush1.msra.mxu0 0.0
    %1876 = vmatprep.mubr.f32.mxu0 0.0
    %1877 = vmatmul.mubr.f32.gmra.mrb[0].mxu0 %v1810
    %v1878 = vpop.f32.mrb[0].mxu0
    %v1879 = vadd.f32 %v1806, %v1878
    %v1880 = vpop.f32.mrb[0].mxu0
    %1881 = vdwg.mxu0
    %vm1882 = vcmask 27648
    %1883 = vst.msk [vmem:[#allocation7] sm:$0xf] %vm1882, %v1879
    // Predicated region
    $region46: #{tpu_custom_call.1} parent=1 // pred_check
      _
    $region47: #{tpu_custom_call.1} parent=1 // pred_check_branch
      %1885 = sbr.rel (0) target = $region49
    $region48: #{tpu_custom_call.1} parent=1 // pred_region
      %s1887 = ssub.s32 64, 64
      %1888 = vsyncadd [#allocation4], %s1887
      %s1890 = sshll.u32 [#allocation7], 4
      %s1891 = int_to_ptr.vmem [resolvable:$true] %s1890
      %1893 = dma.vmem_to_hbm [thread:$0]  %s1891, 64, %s9, [#allocation4]
    $region49: #{tpu_custom_call.1} parent=1 // pred_fallthru
      _
    // Predicated region
    $region50: #{tpu_custom_call.1} parent=1 // pred_check
      _
    $region51: #{tpu_custom_call.1} parent=1 // pred_check_branch
      %1895 = sbr.rel (0) target = $region53
    $region52: #{tpu_custom_call.1} parent=1 // pred_region
      %1896 = dma.done [#allocation4], 64
    $region53: #{tpu_custom_call.1} parent=1 // pred_fallthru
      _
    %1897 = vsyncpa [#allocation3], 1
    %1898 = vsyncpa [#allocation6], 1
    %1899 = vsyncpa [#allocation4], 1

</llo_original>
